<compile_context>
chip_gen: v7x
topology: tpu7x:2x2x1
jax: 0.10.0
libtpu: 0.0.40
codegen_flags: <defaults>
</compile_context>

<pallas_src>
import functools

import jax
import jax.numpy as jnp
import numpy as np
from jax.experimental import pallas as pl
from jax.experimental.pallas import tpu as pltpu

BN_EPS = 1e-5
LANE = 128   # TPU lane width; every kernel-facing last dim is this wide.
HALF = 64    # lane offset where the logvar half of each merged head lives.
NW = 4       # weights per branch in the stacked weight array
NV = 7       # vectors per branch in the stacked vector array


# ---------------------------------------------------------------------------
# In-kernel helper: Linear (no bias) -> BatchNorm1d (training stats) -> ReLU.
# The BN affine is folded into the normalization; the linear bias is omitted
# because the following batch-mean subtraction cancels it exactly.
# ---------------------------------------------------------------------------
def _linear_bn_relu(x, w, gamma, beta):
    h = jnp.dot(x, w, preferred_element_type=jnp.float32)
    mu = jnp.mean(h, axis=0, keepdims=True)                       # XLU
    var = jnp.maximum(jnp.mean(h * h, axis=0, keepdims=True) - mu * mu, 0.0)
    scale = gamma * jax.lax.rsqrt(var + BN_EPS)                   # EUP rsqrt
    shift = beta - mu * scale
    return jnp.maximum(h * scale + shift, 0.0)


# ---------------------------------------------------------------------------
# Fused ToyAE.forward(x, z) kernel, grid=(2,):
#   step 0: encoder  (3 x Linear+BN+ReLU, merged mu|logvar head, reparam)
#   step 1: decoder  (2 x Linear+BN+ReLU, merged mu|logvar head, reparam)
# Each step sees only its own branch's stacked weights / vectors / io slab.
# ---------------------------------------------------------------------------
def toy_ae_kernel(w_ref, v_ref, io_ref, out_ref):
    v = v_ref[...]          # (NV, 128): gammas, betas, head bias
    xin = io_ref[0]         # (B, 128): padded x (encoder) or z (decoder)
    eps = io_ref[1]         # (B, 128): gaussian noise (lane-dense)

    @pl.when(pl.program_id(0) == 0)
    def _encoder():
        h = _linear_bn_relu(xin, w_ref[0], v[0:1], v[1:2])
        h = _linear_bn_relu(h, w_ref[1], v[2:3], v[3:4])
        h = _linear_bn_relu(h, w_ref[2], v[4:5], v[5:6])
        out = jnp.dot(h, w_ref[3], preferred_element_type=jnp.float32) + v[6:7]
        logvar = pltpu.roll(out, shift=HALF, axis=1)   # XLU rotate: align logvar
        out_ref[...] = out + jnp.exp(0.5 * logvar) * eps

    @pl.when(pl.program_id(0) == 1)
    def _decoder():
        g = _linear_bn_relu(xin, w_ref[0], v[0:1], v[1:2])
        g = _linear_bn_relu(g, w_ref[1], v[2:3], v[3:4])
        out = jnp.dot(g, w_ref[2], preferred_element_type=jnp.float32) + v[4:5]
        logvar = pltpu.roll(out, shift=HALF, axis=1)
        out_ref[...] = out + jnp.exp(0.5 * logvar) * eps
    # TODO(synk): eval-mode BatchNorm (running stats) is not implemented; this
    # matches the module in training mode only.


# ---------------------------------------------------------------------------
# One-time parameter packing (hoisted out of the per-call jit path).
# ---------------------------------------------------------------------------
def pack_params(enc_params, dec_params, latent_dim, data_dim, hidden_dim):
    assert hidden_dim == LANE, "kernel assumes hidden_dim == 128"
    (ew1, _eb1, eg1, ebe1, ew2, _eb2, eg2, ebe2,
     ew3, _eb3, eg3, ebe3, ew4, eb4) = enc_params
    (dw1, _db1, dg1, dbe1, dw2, _db2, dg2, dbe2, dw3, db3) = dec_params
    # eb1..eb3 / db1, db2 are dropped: cancelled by training-mode BatchNorm.

    def pad_w(w):  # (in, out) -> (128, 128), zero padded
        return jnp.zeros((LANE, LANE), jnp.float32).at[:w.shape[0], :w.shape[1]].set(w)

    def head_w(w, dim):  # (hidden, 2*dim) -> (128, 128): mu @ lane 0, logvar @ 64
        out = jnp.zeros((LANE, LANE), jnp.float32)
        out = out.at[:, :dim].set(w[:, :dim])
        out = out.at[:, HALF:HALF + dim].set(w[:, dim:])
        return out

    def head_b(b, dim):  # (1, 2*dim) -> (128,)
        out = jnp.zeros((LANE,), jnp.float32)
        out = out.at[:dim].set(b[0, :dim])
        out = out.at[HALF:HALF + dim].set(b[0, dim:])
        return out

    vec = lambda a: a.reshape(LANE)
    zero_w = jnp.zeros((LANE, LANE), jnp.float32)
    zero_v = jnp.zeros((LANE,), jnp.float32)

    enc_w = jnp.stack([pad_w(ew1), pad_w(ew2), pad_w(ew3), head_w(ew4, latent_dim)])
    dec_w = jnp.stack([pad_w(dw1), pad_w(dw2), head_w(dw3, data_dim), zero_w])
    w_stack = jnp.stack([enc_w, dec_w])                      # (2, 4, 128, 128)

    enc_v = jnp.stack([vec(eg1), vec(ebe1), vec(eg2), vec(ebe2),
                       vec(eg3), vec(ebe3), head_b(eb4, latent_dim)])
    dec_v = jnp.stack([vec(dg1), vec(dbe1), vec(dg2), vec(dbe2),
                       head_b(db3, data_dim), zero_v, zero_v])
    v_stack = jnp.stack([enc_v, dec_v])                      # (2, 7, 128)
    return w_stack, v_stack


# ---------------------------------------------------------------------------
# Jitted forward: build the (2, 2, B, 128) io slab, launch the fused kernel.
# ---------------------------------------------------------------------------
@functools.partial(jax.jit, static_argnames=("latent_dim", "data_dim"))
def toy_ae_forward(w_stack, v_stack, x, z, eps_enc, eps_dec,
                   latent_dim, data_dim):
    """ToyAE.forward(x, z) with gaussian enc/dec dists -> (z_fake, x_fake)."""
    B = x.shape[0]
    io = jnp.zeros((2, 2, B, LANE), jnp.float32)
    io = io.at[0, 0, :, :x.shape[1]].set(x)        # encoder input
    io = io.at[0, 1].set(eps_enc)                  # encoder noise (B, 128)
    io = io.at[1, 0, :, :z.shape[1]].set(z)        # decoder input (external z)
    io = io.at[1, 1].set(eps_dec)                  # decoder noise (B, 128)

    n_bytes = 4 * (w_stack.size + v_stack.size + io.size + 2 * B * LANE)
    cost = pl.CostEstimate(flops=2 * 7 * B * LANE * LANE,
                           transcendentals=2 * B * LANE + 5 * LANE,
                           bytes_accessed=n_bytes)

    out = pl.pallas_call(
        toy_ae_kernel,
        out_shape=jax.ShapeDtypeStruct((2, B, LANE), jnp.float32),
        grid_spec=pltpu.PrefetchScalarGridSpec(
            num_scalar_prefetch=0,
            grid=(2,),
            in_specs=[
                pl.BlockSpec((None, NW, LANE, LANE), lambda i: (i, 0, 0, 0)),
                pl.BlockSpec((None, NV, LANE), lambda i: (i, 0, 0)),
                pl.BlockSpec((None, 2, B, LANE), lambda i: (i, 0, 0, 0)),
            ],
            out_specs=pl.BlockSpec((None, B, LANE), lambda i: (i, 0, 0)),
        ),
        compiler_params=pltpu.CompilerParams(
            dimension_semantics=("parallel",)),
        cost_estimate=cost,
    )(w_stack, v_stack, io)

    return out[0, :, :latent_dim], out[1, :, :data_dim]


# ---------------------------------------------------------------------------
# Deterministic parameter initialization (PyTorch nn.Linear-style uniform).
# Weights stored as (in, out) so y = x @ W + b directly.
# ---------------------------------------------------------------------------
def _init_linear(key, fan_in, fan_out):
    k1, k2 = jax.random.split(key)
    bound = 1.0 / np.sqrt(fan_in)
    w = jax.random.uniform(k1, (fan_in, fan_out), jnp.float32, -bound, bound)
    b = jax.random.uniform(k2, (1, fan_out), jnp.float32, -bound, bound)
    return w, b


def init_params(key, data_dim, latent_dim, hidden_dim):
    keys = jax.random.split(key, 8)
    ones = lambda n: jnp.ones((1, n), jnp.float32)
    zeros = lambda n: jnp.zeros((1, n), jnp.float32)

    # Encoder: Lin(d,h)+BN, Lin(h,h)+BN, Lin(h,h)+BN, Lin(h, 2*latent)
    ew1, eb1 = _init_linear(keys[0], data_dim, hidden_dim)
    ew2, eb2 = _init_linear(keys[1], hidden_dim, hidden_dim)
    ew3, eb3 = _init_linear(keys[2], hidden_dim, hidden_dim)
    ew4, eb4 = _init_linear(keys[3], hidden_dim, 2 * latent_dim)
    enc_params = (ew1, eb1, ones(hidden_dim), zeros(hidden_dim),
                  ew2, eb2, ones(hidden_dim), zeros(hidden_dim),
                  ew3, eb3, ones(hidden_dim), zeros(hidden_dim),
                  ew4, eb4)

    # Decoder: Lin(latent,h)+BN, Lin(h,h)+BN, Lin(h, 2*data_dim)
    dw1, db1 = _init_linear(keys[4], latent_dim, hidden_dim)
    dw2, db2 = _init_linear(keys[5], hidden_dim, hidden_dim)
    dw3, db3 = _init_linear(keys[6], hidden_dim, 2 * data_dim)
    dec_params = (dw1, db1, ones(hidden_dim), zeros(hidden_dim),
                  dw2, db2, ones(hidden_dim), zeros(hidden_dim),
                  dw3, db3)
    return enc_params, dec_params


# ---------------------------------------------------------------------------
# Pure-JAX reference (standard BN formulation, WITH the linear biases) — the
# kernel dropping the BN-cancelled biases must still match this.
# ---------------------------------------------------------------------------
def _ref_lbr(x, w, b, g, be):
    h = x @ w + b
    mu = h.mean(0, keepdims=True)
    var = ((h - mu) ** 2).mean(0, keepdims=True)
    return jnp.maximum(g * (h - mu) / jnp.sqrt(var + BN_EPS) + be, 0.0)


def ref_forward(x, z, enc_p, dec_p, eps_enc, eps_dec, latent_dim, data_dim):
    (ew1, eb1, eg1, ebe1, ew2, eb2, eg2, ebe2,
     ew3, eb3, eg3, ebe3, ew4, eb4) = enc_p
    h = _ref_lbr(x, ew1, eb1, eg1, ebe1)
    h = _ref_lbr(h, ew2, eb2, eg2, ebe2)
    h = _ref_lbr(h, ew3, eb3, eg3, ebe3)
    out = h @ ew4 + eb4
    z_mu, z_logvar = out[:, :latent_dim], out[:, latent_dim:]
    z_fake = z_mu + jnp.exp(0.5 * z_logvar) * eps_enc

    (dw1, db1, dg1, dbe1, dw2, db2, dg2, dbe2, dw3, db3) = dec_p
    g = _ref_lbr(z, dw1, db1, dg1, dbe1)
    g = _ref_lbr(g, dw2, db2, dg2, dbe2)
    out = g @ dw3 + db3
    x_mu, x_logvar = out[:, :data_dim], out[:, data_dim:]
    x_fake = x_mu + jnp.exp(0.5 * x_logvar) * eps_dec
    return z_fake, x_fake


# ---------------------------------------------------------------------------
if __name__ == "__main__":
    B, DATA_DIM, LATENT_DIM, HIDDEN = 8, 4, 8, 128

    key = jax.random.PRNGKey(0)
    k_x, k_z, k_p, k_e1, k_e2 = jax.random.split(key, 5)

    x = jax.random.normal(k_x, (B, DATA_DIM), jnp.float32)
    z = jax.random.normal(k_z, (B, LATENT_DIM), jnp.float32)
    enc_params, dec_params = init_params(k_p, DATA_DIM, LATENT_DIM, HIDDEN)

    # Noise generated directly lane-dense (B, 128); only the first
    # latent_dim / data_dim lanes are semantically meaningful.
    eps_enc = jax.random.normal(k_e1, (B, LANE), jnp.float32)
    eps_dec = jax.random.normal(k_e2, (B, LANE), jnp.float32)

    # One-time packing (outside the per-call jit path).
    w_stack, v_stack = pack_params(enc_params, dec_params,
                                   LATENT_DIM, DATA_DIM, HIDDEN)

    z_fake, x_fake = toy_ae_forward(w_stack, v_stack, x, z, eps_enc, eps_dec,
                                    latent_dim=LATENT_DIM, data_dim=DATA_DIM)
    z_fake, x_fake = jax.block_until_ready((z_fake, x_fake))

    z_ref, x_ref = ref_forward(x, z, enc_params, dec_params,
                               eps_enc[:, :LATENT_DIM], eps_dec[:, :DATA_DIM],
                               LATENT_DIM, DATA_DIM)
    np.testing.assert_allclose(np.asarray(z_fake), np.asarray(z_ref),
                               rtol=1e-4, atol=1e-4)
    np.testing.assert_allclose(np.asarray(x_fake), np.asarray(x_ref),
                               rtol=1e-4, atol=1e-4)

    print("KERNEL_OK")
</pallas_src>

<mosaic_0001>
module attributes {stable_mosaic.version = 11 : i64} {
  func.func @toy_ae_kernel(%arg0: i32, %arg1: memref<1x4x128x128xf32, #tpu.memory_space<vmem>>, %arg2: memref<1x7x128xf32, #tpu.memory_space<vmem>>, %arg3: memref<1x2x8x128xf32, #tpu.memory_space<vmem>>, %arg4: memref<1x8x128xf32, #tpu.memory_space<vmem>>) attributes {dimension_semantics = [#tpu.dimension_semantics<parallel>], iteration_bounds = array<i64: 2>, scalar_prefetch = 0 : i64, scratch_operands = 0 : i64, tpu.core_type = #tpu.core_type<tc>, window_params = [{transform_indices = @transform_0, window_bounds = array<i64: 1, 4, 128, 128>}, {transform_indices = @transform_1, window_bounds = array<i64: 1, 7, 128>}, {transform_indices = @transform_2, window_bounds = array<i64: 1, 2, 8, 128>}, {transform_indices = @transform_3, window_bounds = array<i64: 1, 8, 128>}]} {
    %c0 = arith.constant 0 : index
    %c0_0 = arith.constant 0 : index
    %c0_1 = arith.constant 0 : index
    %0 = vector.load %arg2[%c0, %c0_0, %c0_1] : memref<1x7x128xf32, #tpu.memory_space<vmem>>, vector<1x7x128xf32>
    %1 = vector.shape_cast %0 : vector<1x7x128xf32> to vector<7x128xf32>
    %c0_2 = arith.constant 0 : index
    %c0_3 = arith.constant 0 : index
    %c0_4 = arith.constant 0 : index
    %c0_5 = arith.constant 0 : index
    %2 = vector.load %arg3[%c0_2, %c0_3, %c0_4, %c0_5] : memref<1x2x8x128xf32, #tpu.memory_space<vmem>>, vector<1x1x8x128xf32>
    %3 = vector.shape_cast %2 : vector<1x1x8x128xf32> to vector<8x128xf32>
    %c0_6 = arith.constant 0 : index
    %c1 = arith.constant 1 : index
    %c0_7 = arith.constant 0 : index
    %c0_8 = arith.constant 0 : index
    %4 = vector.load %arg3[%c0_6, %c1, %c0_7, %c0_8] : memref<1x2x8x128xf32, #tpu.memory_space<vmem>>, vector<1x1x8x128xf32>
    %5 = vector.shape_cast %4 : vector<1x1x8x128xf32> to vector<8x128xf32>
    %c0_i32 = arith.constant 0 : i32
    %6 = arith.cmpi eq, %arg0, %c0_i32 : i32
    %7 = arith.extui %6 : i1 to i32
    %c0_i32_9 = arith.constant 0 : i32
    %8 = arith.cmpi ne, %7, %c0_i32_9 : i32
    scf.if %8 {
      %c0_11 = arith.constant 0 : index
      %c0_12 = arith.constant 0 : index
      %c0_13 = arith.constant 0 : index
      %c0_14 = arith.constant 0 : index
      %12 = vector.load %arg1[%c0_11, %c0_12, %c0_13, %c0_14] : memref<1x4x128x128xf32, #tpu.memory_space<vmem>>, vector<1x1x128x128xf32>
      %13 = vector.shape_cast %12 : vector<1x1x128x128xf32> to vector<128x128xf32>
      %14 = vector.extract_strided_slice %1 {offsets = [0, 0], sizes = [1, 128], strides = [1, 1]} : vector<7x128xf32> to vector<1x128xf32>
      %15 = vector.extract_strided_slice %1 {offsets = [1, 0], sizes = [1, 128], strides = [1, 1]} : vector<7x128xf32> to vector<1x128xf32>
      %cst = arith.constant dense<0.000000e+00> : vector<8x128xf32>
      %16 = tpu.matmul %3, %13, %cst {dimension_numbers = #tpu.dot_dimension_numbers<[1], [0], [0], [1], [0, 0, 1, 1], [], []>} : vector<8x128xf32>, vector<128x128xf32>, vector<8x128xf32> -> vector<8x128xf32>
      %cst_15 = arith.constant dense<0.000000e+00> : vector<128xf32>
      %17 = vector.multi_reduction <add>, %16, %cst_15 [0] : vector<8x128xf32> to vector<128xf32>
      %18 = vector.shape_cast %17 : vector<128xf32> to vector<1x128xf32>
      %cst_16 = arith.constant 8.000000e+00 : f32
      %19 = vector.broadcast %cst_16 : f32 to vector<1x128xf32>
      %20 = arith.divf %18, %19 : vector<1x128xf32>
      %21 = arith.mulf %16, %16 : vector<8x128xf32>
      %cst_17 = arith.constant dense<0.000000e+00> : vector<128xf32>
      %22 = vector.multi_reduction <add>, %21, %cst_17 [0] : vector<8x128xf32> to vector<128xf32>
      %23 = vector.shape_cast %22 : vector<128xf32> to vector<1x128xf32>
      %cst_18 = arith.constant 8.000000e+00 : f32
      %24 = vector.broadcast %cst_18 : f32 to vector<1x128xf32>
      %25 = arith.divf %23, %24 : vector<1x128xf32>
      %26 = arith.mulf %20, %20 : vector<1x128xf32>
      %27 = arith.subf %25, %26 : vector<1x128xf32>
      %cst_19 = arith.constant 0.000000e+00 : f32
      %28 = vector.broadcast %cst_19 : f32 to vector<1x128xf32>
      %29 = arith.maximumf %27, %28 : vector<1x128xf32>
      %cst_20 = arith.constant 9.99999974E-6 : f32
      %30 = vector.broadcast %cst_20 : f32 to vector<1x128xf32>
      %31 = arith.addf %29, %30 : vector<1x128xf32>
      %32 = math.rsqrt %31 : vector<1x128xf32>
      %33 = arith.mulf %14, %32 : vector<1x128xf32>
      %34 = arith.mulf %20, %33 : vector<1x128xf32>
      %35 = arith.subf %15, %34 : vector<1x128xf32>
      %36 = vector.broadcast %33 : vector<1x128xf32> to vector<8x128xf32>
      %37 = arith.mulf %16, %36 : vector<8x128xf32>
      %38 = vector.broadcast %35 : vector<1x128xf32> to vector<8x128xf32>
      %39 = arith.addf %37, %38 : vector<8x128xf32>
      %cst_21 = arith.constant 0.000000e+00 : f32
      %40 = vector.broadcast %cst_21 : f32 to vector<8x128xf32>
      %41 = arith.maximumf %39, %40 : vector<8x128xf32>
      %c0_22 = arith.constant 0 : index
      %c1_23 = arith.constant 1 : index
      %c0_24 = arith.constant 0 : index
      %c0_25 = arith.constant 0 : index
      %42 = vector.load %arg1[%c0_22, %c1_23, %c0_24, %c0_25] : memref<1x4x128x128xf32, #tpu.memory_space<vmem>>, vector<1x1x128x128xf32>
      %43 = vector.shape_cast %42 : vector<1x1x128x128xf32> to vector<128x128xf32>
      %44 = vector.extract_strided_slice %1 {offsets = [2, 0], sizes = [1, 128], strides = [1, 1]} : vector<7x128xf32> to vector<1x128xf32>
      %45 = vector.extract_strided_slice %1 {offsets = [3, 0], sizes = [1, 128], strides = [1, 1]} : vector<7x128xf32> to vector<1x128xf32>
      %cst_26 = arith.constant dense<0.000000e+00> : vector<8x128xf32>
      %46 = tpu.matmul %41, %43, %cst_26 {dimension_numbers = #tpu.dot_dimension_numbers<[1], [0], [0], [1], [0, 0, 1, 1], [], []>} : vector<8x128xf32>, vector<128x128xf32>, vector<8x128xf32> -> vector<8x128xf32>
      %cst_27 = arith.constant dense<0.000000e+00> : vector<128xf32>
      %47 = vector.multi_reduction <add>, %46, %cst_27 [0] : vector<8x128xf32> to vector<128xf32>
      %48 = vector.shape_cast %47 : vector<128xf32> to vector<1x128xf32>
      %cst_28 = arith.constant 8.000000e+00 : f32
      %49 = vector.broadcast %cst_28 : f32 to vector<1x128xf32>
      %50 = arith.divf %48, %49 : vector<1x128xf32>
      %51 = arith.mulf %46, %46 : vector<8x128xf32>
      %cst_29 = arith.constant dense<0.000000e+00> : vector<128xf32>
      %52 = vector.multi_reduction <add>, %51, %cst_29 [0] : vector<8x128xf32> to vector<128xf32>
      %53 = vector.shape_cast %52 : vector<128xf32> to vector<1x128xf32>
      %cst_30 = arith.constant 8.000000e+00 : f32
      %54 = vector.broadcast %cst_30 : f32 to vector<1x128xf32>
      %55 = arith.divf %53, %54 : vector<1x128xf32>
      %56 = arith.mulf %50, %50 : vector<1x128xf32>
      %57 = arith.subf %55, %56 : vector<1x128xf32>
      %cst_31 = arith.constant 0.000000e+00 : f32
      %58 = vector.broadcast %cst_31 : f32 to vector<1x128xf32>
      %59 = arith.maximumf %57, %58 : vector<1x128xf32>
      %cst_32 = arith.constant 9.99999974E-6 : f32
      %60 = vector.broadcast %cst_32 : f32 to vector<1x128xf32>
      %61 = arith.addf %59, %60 : vector<1x128xf32>
      %62 = math.rsqrt %61 : vector<1x128xf32>
      %63 = arith.mulf %44, %62 : vector<1x128xf32>
      %64 = arith.mulf %50, %63 : vector<1x128xf32>
      %65 = arith.subf %45, %64 : vector<1x128xf32>
      %66 = vector.broadcast %63 : vector<1x128xf32> to vector<8x128xf32>
      %67 = arith.mulf %46, %66 : vector<8x128xf32>
      %68 = vector.broadcast %65 : vector<1x128xf32> to vector<8x128xf32>
      %69 = arith.addf %67, %68 : vector<8x128xf32>
      %cst_33 = arith.constant 0.000000e+00 : f32
      %70 = vector.broadcast %cst_33 : f32 to vector<8x128xf32>
      %71 = arith.maximumf %69, %70 : vector<8x128xf32>
      %c0_34 = arith.constant 0 : index
      %c2 = arith.constant 2 : index
      %c0_35 = arith.constant 0 : index
      %c0_36 = arith.constant 0 : index
      %72 = vector.load %arg1[%c0_34, %c2, %c0_35, %c0_36] : memref<1x4x128x128xf32, #tpu.memory_space<vmem>>, vector<1x1x128x128xf32>
      %73 = vector.shape_cast %72 : vector<1x1x128x128xf32> to vector<128x128xf32>
      %74 = vector.extract_strided_slice %1 {offsets = [4, 0], sizes = [1, 128], strides = [1, 1]} : vector<7x128xf32> to vector<1x128xf32>
      %75 = vector.extract_strided_slice %1 {offsets = [5, 0], sizes = [1, 128], strides = [1, 1]} : vector<7x128xf32> to vector<1x128xf32>
      %cst_37 = arith.constant dense<0.000000e+00> : vector<8x128xf32>
      %76 = tpu.matmul %71, %73, %cst_37 {dimension_numbers = #tpu.dot_dimension_numbers<[1], [0], [0], [1], [0, 0, 1, 1], [], []>} : vector<8x128xf32>, vector<128x128xf32>, vector<8x128xf32> -> vector<8x128xf32>
      %cst_38 = arith.constant dense<0.000000e+00> : vector<128xf32>
      %77 = vector.multi_reduction <add>, %76, %cst_38 [0] : vector<8x128xf32> to vector<128xf32>
      %78 = vector.shape_cast %77 : vector<128xf32> to vector<1x128xf32>
      %cst_39 = arith.constant 8.000000e+00 : f32
      %79 = vector.broadcast %cst_39 : f32 to vector<1x128xf32>
      %80 = arith.divf %78, %79 : vector<1x128xf32>
      %81 = arith.mulf %76, %76 : vector<8x128xf32>
      %cst_40 = arith.constant dense<0.000000e+00> : vector<128xf32>
      %82 = vector.multi_reduction <add>, %81, %cst_40 [0] : vector<8x128xf32> to vector<128xf32>
      %83 = vector.shape_cast %82 : vector<128xf32> to vector<1x128xf32>
      %cst_41 = arith.constant 8.000000e+00 : f32
      %84 = vector.broadcast %cst_41 : f32 to vector<1x128xf32>
      %85 = arith.divf %83, %84 : vector<1x128xf32>
      %86 = arith.mulf %80, %80 : vector<1x128xf32>
      %87 = arith.subf %85, %86 : vector<1x128xf32>
      %cst_42 = arith.constant 0.000000e+00 : f32
      %88 = vector.broadcast %cst_42 : f32 to vector<1x128xf32>
      %89 = arith.maximumf %87, %88 : vector<1x128xf32>
      %cst_43 = arith.constant 9.99999974E-6 : f32
      %90 = vector.broadcast %cst_43 : f32 to vector<1x128xf32>
      %91 = arith.addf %89, %90 : vector<1x128xf32>
      %92 = math.rsqrt %91 : vector<1x128xf32>
      %93 = arith.mulf %74, %92 : vector<1x128xf32>
      %94 = arith.mulf %80, %93 : vector<1x128xf32>
      %95 = arith.subf %75, %94 : vector<1x128xf32>
      %96 = vector.broadcast %93 : vector<1x128xf32> to vector<8x128xf32>
      %97 = arith.mulf %76, %96 : vector<8x128xf32>
      %98 = vector.broadcast %95 : vector<1x128xf32> to vector<8x128xf32>
      %99 = arith.addf %97, %98 : vector<8x128xf32>
      %cst_44 = arith.constant 0.000000e+00 : f32
      %100 = vector.broadcast %cst_44 : f32 to vector<8x128xf32>
      %101 = arith.maximumf %99, %100 : vector<8x128xf32>
      %c0_45 = arith.constant 0 : index
      %c3 = arith.constant 3 : index
      %c0_46 = arith.constant 0 : index
      %c0_47 = arith.constant 0 : index
      %102 = vector.load %arg1[%c0_45, %c3, %c0_46, %c0_47] : memref<1x4x128x128xf32, #tpu.memory_space<vmem>>, vector<1x1x128x128xf32>
      %103 = vector.shape_cast %102 : vector<1x1x128x128xf32> to vector<128x128xf32>
      %cst_48 = arith.constant dense<0.000000e+00> : vector<8x128xf32>
      %104 = tpu.matmul %101, %103, %cst_48 {dimension_numbers = #tpu.dot_dimension_numbers<[1], [0], [0], [1], [0, 0, 1, 1], [], []>} : vector<8x128xf32>, vector<128x128xf32>, vector<8x128xf32> -> vector<8x128xf32>
      %105 = vector.extract_strided_slice %1 {offsets = [6, 0], sizes = [1, 128], strides = [1, 1]} : vector<7x128xf32> to vector<1x128xf32>
      %106 = vector.broadcast %105 : vector<1x128xf32> to vector<8x128xf32>
      %107 = arith.addf %104, %106 : vector<8x128xf32>
      %c64_i32 = arith.constant 64 : i32
      %108 = tpu.dynamic_rotate %107 by %c64_i32 dim 1 : vector<8x128xf32>, i32 -> vector<8x128xf32>
      %cst_49 = arith.constant 5.000000e-01 : f32
      %109 = vector.broadcast %cst_49 : f32 to vector<8x128xf32>
      %110 = arith.mulf %109, %108 : vector<8x128xf32>
      %111 = math.exp %110 : vector<8x128xf32>
      %112 = arith.mulf %111, %5 : vector<8x128xf32>
      %113 = arith.addf %107, %112 : vector<8x128xf32>
      %c0_50 = arith.constant 0 : index
      %c0_51 = arith.constant 0 : index
      %c0_52 = arith.constant 0 : index
      %114 = vector.load %arg4[%c0_50, %c0_51, %c0_52] : memref<1x8x128xf32, #tpu.memory_space<vmem>>, vector<1x8x128xf32>
      %115 = vector.shape_cast %114 : vector<1x8x128xf32> to vector<8x128xf32>
      %116 = vector.shape_cast %113 : vector<8x128xf32> to vector<1x8x128xf32>
      tpu.vector_store %arg4[%c0_50, %c0_51, %c0_52], %116 {strides = array<i32>} : memref<1x8x128xf32, #tpu.memory_space<vmem>>, vector<1x8x128xf32>,
    } else {
    }
    %c1_i32 = arith.constant 1 : i32
    %9 = arith.cmpi eq, %arg0, %c1_i32 : i32
    %10 = arith.extui %9 : i1 to i32
    %c0_i32_10 = arith.constant 0 : i32
    %11 = arith.cmpi ne, %10, %c0_i32_10 : i32
    scf.if %11 {
      %c0_11 = arith.constant 0 : index
      %c0_12 = arith.constant 0 : index
      %c0_13 = arith.constant 0 : index
      %c0_14 = arith.constant 0 : index
      %12 = vector.load %arg1[%c0_11, %c0_12, %c0_13, %c0_14] : memref<1x4x128x128xf32, #tpu.memory_space<vmem>>, vector<1x1x128x128xf32>
      %13 = vector.shape_cast %12 : vector<1x1x128x128xf32> to vector<128x128xf32>
      %14 = vector.extract_strided_slice %1 {offsets = [0, 0], sizes = [1, 128], strides = [1, 1]} : vector<7x128xf32> to vector<1x128xf32>
      %15 = vector.extract_strided_slice %1 {offsets = [1, 0], sizes = [1, 128], strides = [1, 1]} : vector<7x128xf32> to vector<1x128xf32>
      %cst = arith.constant dense<0.000000e+00> : vector<8x128xf32>
      %16 = tpu.matmul %3, %13, %cst {dimension_numbers = #tpu.dot_dimension_numbers<[1], [0], [0], [1], [0, 0, 1, 1], [], []>} : vector<8x128xf32>, vector<128x128xf32>, vector<8x128xf32> -> vector<8x128xf32>
      %cst_15 = arith.constant dense<0.000000e+00> : vector<128xf32>
      %17 = vector.multi_reduction <add>, %16, %cst_15 [0] : vector<8x128xf32> to vector<128xf32>
      %18 = vector.shape_cast %17 : vector<128xf32> to vector<1x128xf32>
      %cst_16 = arith.constant 8.000000e+00 : f32
      %19 = vector.broadcast %cst_16 : f32 to vector<1x128xf32>
      %20 = arith.divf %18, %19 : vector<1x128xf32>
      %21 = arith.mulf %16, %16 : vector<8x128xf32>
      %cst_17 = arith.constant dense<0.000000e+00> : vector<128xf32>
      %22 = vector.multi_reduction <add>, %21, %cst_17 [0] : vector<8x128xf32> to vector<128xf32>
      %23 = vector.shape_cast %22 : vector<128xf32> to vector<1x128xf32>
      %cst_18 = arith.constant 8.000000e+00 : f32
      %24 = vector.broadcast %cst_18 : f32 to vector<1x128xf32>
      %25 = arith.divf %23, %24 : vector<1x128xf32>
      %26 = arith.mulf %20, %20 : vector<1x128xf32>
      %27 = arith.subf %25, %26 : vector<1x128xf32>
      %cst_19 = arith.constant 0.000000e+00 : f32
      %28 = vector.broadcast %cst_19 : f32 to vector<1x128xf32>
      %29 = arith.maximumf %27, %28 : vector<1x128xf32>
      %cst_20 = arith.constant 9.99999974E-6 : f32
      %30 = vector.broadcast %cst_20 : f32 to vector<1x128xf32>
      %31 = arith.addf %29, %30 : vector<1x128xf32>
      %32 = math.rsqrt %31 : vector<1x128xf32>
      %33 = arith.mulf %14, %32 : vector<1x128xf32>
      %34 = arith.mulf %20, %33 : vector<1x128xf32>
      %35 = arith.subf %15, %34 : vector<1x128xf32>
      %36 = vector.broadcast %33 : vector<1x128xf32> to vector<8x128xf32>
      %37 = arith.mulf %16, %36 : vector<8x128xf32>
      %38 = vector.broadcast %35 : vector<1x128xf32> to vector<8x128xf32>
      %39 = arith.addf %37, %38 : vector<8x128xf32>
      %cst_21 = arith.constant 0.000000e+00 : f32
      %40 = vector.broadcast %cst_21 : f32 to vector<8x128xf32>
      %41 = arith.maximumf %39, %40 : vector<8x128xf32>
      %c0_22 = arith.constant 0 : index
      %c1_23 = arith.constant 1 : index
      %c0_24 = arith.constant 0 : index
      %c0_25 = arith.constant 0 : index
      %42 = vector.load %arg1[%c0_22, %c1_23, %c0_24, %c0_25] : memref<1x4x128x128xf32, #tpu.memory_space<vmem>>, vector<1x1x128x128xf32>
      %43 = vector.shape_cast %42 : vector<1x1x128x128xf32> to vector<128x128xf32>
      %44 = vector.extract_strided_slice %1 {offsets = [2, 0], sizes = [1, 128], strides = [1, 1]} : vector<7x128xf32> to vector<1x128xf32>
      %45 = vector.extract_strided_slice %1 {offsets = [3, 0], sizes = [1, 128], strides = [1, 1]} : vector<7x128xf32> to vector<1x128xf32>
      %cst_26 = arith.constant dense<0.000000e+00> : vector<8x128xf32>
      %46 = tpu.matmul %41, %43, %cst_26 {dimension_numbers = #tpu.dot_dimension_numbers<[1], [0], [0], [1], [0, 0, 1, 1], [], []>} : vector<8x128xf32>, vector<128x128xf32>, vector<8x128xf32> -> vector<8x128xf32>
      %cst_27 = arith.constant dense<0.000000e+00> : vector<128xf32>
      %47 = vector.multi_reduction <add>, %46, %cst_27 [0] : vector<8x128xf32> to vector<128xf32>
      %48 = vector.shape_cast %47 : vector<128xf32> to vector<1x128xf32>
      %cst_28 = arith.constant 8.000000e+00 : f32
      %49 = vector.broadcast %cst_28 : f32 to vector<1x128xf32>
      %50 = arith.divf %48, %49 : vector<1x128xf32>
      %51 = arith.mulf %46, %46 : vector<8x128xf32>
      %cst_29 = arith.constant dense<0.000000e+00> : vector<128xf32>
      %52 = vector.multi_reduction <add>, %51, %cst_29 [0] : vector<8x128xf32> to vector<128xf32>
      %53 = vector.shape_cast %52 : vector<128xf32> to vector<1x128xf32>
      %cst_30 = arith.constant 8.000000e+00 : f32
      %54 = vector.broadcast %cst_30 : f32 to vector<1x128xf32>
      %55 = arith.divf %53, %54 : vector<1x128xf32>
      %56 = arith.mulf %50, %50 : vector<1x128xf32>
      %57 = arith.subf %55, %56 : vector<1x128xf32>
      %cst_31 = arith.constant 0.000000e+00 : f32
      %58 = vector.broadcast %cst_31 : f32 to vector<1x128xf32>
      %59 = arith.maximumf %57, %58 : vector<1x128xf32>
      %cst_32 = arith.constant 9.99999974E-6 : f32
      %60 = vector.broadcast %cst_32 : f32 to vector<1x128xf32>
      %61 = arith.addf %59, %60 : vector<1x128xf32>
      %62 = math.rsqrt %61 : vector<1x128xf32>
      %63 = arith.mulf %44, %62 : vector<1x128xf32>
      %64 = arith.mulf %50, %63 : vector<1x128xf32>
      %65 = arith.subf %45, %64 : vector<1x128xf32>
      %66 = vector.broadcast %63 : vector<1x128xf32> to vector<8x128xf32>
      %67 = arith.mulf %46, %66 : vector<8x128xf32>
      %68 = vector.broadcast %65 : vector<1x128xf32> to vector<8x128xf32>
      %69 = arith.addf %67, %68 : vector<8x128xf32>
      %cst_33 = arith.constant 0.000000e+00 : f32
      %70 = vector.broadcast %cst_33 : f32 to vector<8x128xf32>
      %71 = arith.maximumf %69, %70 : vector<8x128xf32>
      %c0_34 = arith.constant 0 : index
      %c2 = arith.constant 2 : index
      %c0_35 = arith.constant 0 : index
      %c0_36 = arith.constant 0 : index
      %72 = vector.load %arg1[%c0_34, %c2, %c0_35, %c0_36] : memref<1x4x128x128xf32, #tpu.memory_space<vmem>>, vector<1x1x128x128xf32>
      %73 = vector.shape_cast %72 : vector<1x1x128x128xf32> to vector<128x128xf32>
      %cst_37 = arith.constant dense<0.000000e+00> : vector<8x128xf32>
      %74 = tpu.matmul %71, %73, %cst_37 {dimension_numbers = #tpu.dot_dimension_numbers<[1], [0], [0], [1], [0, 0, 1, 1], [], []>} : vector<8x128xf32>, vector<128x128xf32>, vector<8x128xf32> -> vector<8x128xf32>
      %75 = vector.extract_strided_slice %1 {offsets = [4, 0], sizes = [1, 128], strides = [1, 1]} : vector<7x128xf32> to vector<1x128xf32>
      %76 = vector.broadcast %75 : vector<1x128xf32> to vector<8x128xf32>
      %77 = arith.addf %74, %76 : vector<8x128xf32>
      %c64_i32 = arith.constant 64 : i32
      %78 = tpu.dynamic_rotate %77 by %c64_i32 dim 1 : vector<8x128xf32>, i32 -> vector<8x128xf32>
      %cst_38 = arith.constant 5.000000e-01 : f32
      %79 = vector.broadcast %cst_38 : f32 to vector<8x128xf32>
      %80 = arith.mulf %79, %78 : vector<8x128xf32>
      %81 = math.exp %80 : vector<8x128xf32>
      %82 = arith.mulf %81, %5 : vector<8x128xf32>
      %83 = arith.addf %77, %82 : vector<8x128xf32>
      %c0_39 = arith.constant 0 : index
      %c0_40 = arith.constant 0 : index
      %c0_41 = arith.constant 0 : index
      %84 = vector.load %arg4[%c0_39, %c0_40, %c0_41] : memref<1x8x128xf32, #tpu.memory_space<vmem>>, vector<1x8x128xf32>
      %85 = vector.shape_cast %84 : vector<1x8x128xf32> to vector<8x128xf32>
      %86 = vector.shape_cast %83 : vector<8x128xf32> to vector<1x8x128xf32>
      tpu.vector_store %arg4[%c0_39, %c0_40, %c0_41], %86 {strides = array<i32>} : memref<1x8x128xf32, #tpu.memory_space<vmem>>, vector<1x8x128xf32>,
    } else {
    }
    return
  }
  func.func @transform_0(%arg0: i32) -> (i32, i32, i32, i32) {
    %c0_i32 = arith.constant 0 : i32
    %c0_i32_0 = arith.constant 0 : i32
    %c0_i32_1 = arith.constant 0 : i32
    %c0_i32_2 = arith.constant 0 : i32
    return %arg0, %c0_i32, %c0_i32_0, %c0_i32_1 : i32, i32, i32, i32
  }
  func.func @transform_1(%arg0: i32) -> (i32, i32, i32) {
    %c0_i32 = arith.constant 0 : i32
    %c0_i32_0 = arith.constant 0 : i32
    %c0_i32_1 = arith.constant 0 : i32
    return %arg0, %c0_i32, %c0_i32_0 : i32, i32, i32
  }
  func.func @transform_2(%arg0: i32) -> (i32, i32, i32, i32) {
    %c0_i32 = arith.constant 0 : i32
    %c0_i32_0 = arith.constant 0 : i32
    %c0_i32_1 = arith.constant 0 : i32
    %c0_i32_2 = arith.constant 0 : i32
    return %arg0, %c0_i32, %c0_i32_0, %c0_i32_1 : i32, i32, i32, i32
  }
  func.func @transform_3(%arg0: i32) -> (i32, i32, i32) {
    %c0_i32 = arith.constant 0 : i32
    %c0_i32_0 = arith.constant 0 : i32
    %c0_i32_1 = arith.constant 0 : i32
    return %arg0, %c0_i32, %c0_i32_0 : i32, i32, i32
  }
}

</mosaic_0001>

<llo_original>
// kernel: toy_ae_forward.1
$region0: #{toy_ae_forward.1}
  #allocation0 [shape = 'u32[]', space=smem, size = 0x4, offset = 0x4, fixed_abs, tag = 'smem constant byte address 0x4 - core index']
  #allocation1 [shape = 'u32[144,128]{1,0:T(1,128)}', space=vmem, size = 0x12000, scoped, tag = 'internal scratch']
  %s0 = inlined_call_operand.hbm [shape: f32[2,4,128,128], index: 0, kind: input, shape index: {}]
  %s1 = inlined_call_operand.vmem [shape: f32[2,7,128], index: 1, kind: input, shape index: {}]
  %s2 = inlined_call_operand.vmem [shape: f32[2,2,8,128], index: 2, kind: input, shape index: {}]
  %s3 = inlined_call_operand.vmem [shape: f32[2,8,128], index: 3, kind: output, shape index: {}]
  %s4 = sld [smem:[#allocation0]]
  $region57: #{toy_ae_forward.1} parent=0
    _
  %s6 = ssub.s32 1, %s4
  %s7 = scalar_select 0, %s6, %s4
  $region1: #{toy_ae_forward.1} parent=0
    #allocation2 [shape = 'u8[524288]{0}', space=vmem, size = 0x80000, scoped, tag = 'input window, operand 0']
    #allocation3 [shape = 's32[2]{0}', space=sflag, size = 0x8, scoped, tag = 'scoped memory for toy_ae_forward.1']
    %8 = vsyncpa [#allocation3], 0
    %s9 = scalar_lea.sflag [#allocation3], 1
    %10 = vsyncpa %s9, 0
    loop: start=0, step=1, limit=4
    $region2: #{toy_ae_forward.1} parent=1 // loop_pre_header
      _
    $region3: #{toy_ae_forward.1} parent=1 // loop_header
      %s12 = sphi 0, %s16
      %p13 = scmp.ge.s32.totalorder %s12, 4
      %s22 = sphi 0, %s24
      %s25 = sphi 0, %s22
      %s26 = sphi 0, %s25
      %s42 = sphi 0, %s26
      %s48 = sphi 0, %s50
      %s51 = sphi 0, %s48
      %s52 = sphi 0, %s51
      %s68 = sphi 0, %s52
      %s74 = sphi 0, %s76
      %s77 = sphi 0, %s74
      %s78 = sphi 0, %s77
      %s94 = sphi 0, %s78
      %s100 = sphi 0, %s102
      %s103 = sphi 0, %s100
      %s104 = sphi 0, %s103
      %s120 = sphi 0, %s104
    $region4: #{toy_ae_forward.1} parent=1 // loop_header_branch
      %15 = sbr.rel (%p13) target = $region8
    $region5: #{toy_ae_forward.1} parent=1 // loop_body
      %s17 = ssub.s32 %s12, 1
      %s18 = ssub.s32 %s12, 2
      %s19 = sadd.s32 %s12, 1
      %s20 = ssub.s32 %s12, %s19
      %p21 = scmp.eq.s32.totalorder %s20, 0
      %s23 = sadd.s32 %s22, 1
      %s24 = scalar_select %p21, %s22, %s23
      %p27 = pneg %p21
      %p28 = scmp.eq.s32.totalorder %s12, 1
      %p29 = por %p27, %p28
      %p30 = scmp.ne.s32.totalorder %s22, %s25
      %p31 = scmp.eq.s32.totalorder %s12, 0
      %p32 = por %p30, %p31
      %p33 = scmp.ne.s32.totalorder %s22, %s25
      %p34 = scmp.eq.s32.totalorder %s17, 1
      %p35 = por %p33, %p34
      %p36 = scmp.ne.s32.totalorder %s25, %s26
      %p37 = scmp.eq.s32.totalorder %s17, 0
      %p38 = por %p36, %p37
      %p39 = scmp.ne.s32.totalorder %s25, %s26
      %p40 = scmp.eq.s32.totalorder %s18, 1
      %p41 = por %p39, %p40
      %p43 = scmp.ne.s32.totalorder %s26, %s42
      %p44 = scmp.eq.s32.totalorder %s18, 0
      %p45 = por %p43, %p44
      %s46 = ssub.s32 %s12, %s19
      %p47 = scmp.eq.s32.totalorder %s46, 0
      %s49 = sadd.s32 %s48, 1
      %s50 = scalar_select %p47, %s48, %s49
      %p53 = pneg %p47
      %p54 = scmp.eq.s32.totalorder %s12, 1
      %p55 = por %p53, %p54
      %p56 = scmp.ne.s32.totalorder %s48, %s51
      %p57 = scmp.eq.s32.totalorder %s12, 0
      %p58 = por %p56, %p57
      %p59 = scmp.ne.s32.totalorder %s48, %s51
      %p60 = scmp.eq.s32.totalorder %s17, 1
      %p61 = por %p59, %p60
      %p62 = scmp.ne.s32.totalorder %s51, %s52
      %p63 = scmp.eq.s32.totalorder %s17, 0
      %p64 = por %p62, %p63
      %p65 = scmp.ne.s32.totalorder %s51, %s52
      %p66 = scmp.eq.s32.totalorder %s18, 1
      %p67 = por %p65, %p66
      %p69 = scmp.ne.s32.totalorder %s52, %s68
      %p70 = scmp.eq.s32.totalorder %s18, 0
      %p71 = por %p69, %p70
      %s72 = ssub.s32 %s12, %s19
      %p73 = scmp.eq.s32.totalorder %s72, 0
      %s75 = sadd.s32 %s74, 1
      %s76 = scalar_select %p73, %s74, %s75
      %p79 = pneg %p73
      %p80 = scmp.eq.s32.totalorder %s12, 1
      %p81 = por %p79, %p80
      %p82 = scmp.ne.s32.totalorder %s74, %s77
      %p83 = scmp.eq.s32.totalorder %s12, 0
      %p84 = por %p82, %p83
      %p85 = scmp.ne.s32.totalorder %s74, %s77
      %p86 = scmp.eq.s32.totalorder %s17, 1
      %p87 = por %p85, %p86
      %p88 = scmp.ne.s32.totalorder %s77, %s78
      %p89 = scmp.eq.s32.totalorder %s17, 0
      %p90 = por %p88, %p89
      %p91 = scmp.ne.s32.totalorder %s77, %s78
      %p92 = scmp.eq.s32.totalorder %s18, 1
      %p93 = por %p91, %p92
      %p95 = scmp.ne.s32.totalorder %s78, %s94
      %p96 = scmp.eq.s32.totalorder %s18, 0
      %p97 = por %p95, %p96
      %s98 = ssub.s32 %s12, %s19
      %p99 = scmp.eq.s32.totalorder %s98, 0
      %s101 = sadd.s32 %s100, 1
      %s102 = scalar_select %p99, %s100, %s101
      %p105 = pneg %p99
      %p106 = scmp.eq.s32.totalorder %s12, 1
      %p107 = por %p105, %p106
      %p108 = scmp.ne.s32.totalorder %s100, %s103
      %p109 = scmp.eq.s32.totalorder %s12, 0
      %p110 = por %p108, %p109
      %p111 = scmp.ne.s32.totalorder %s100, %s103
      %p112 = scmp.eq.s32.totalorder %s17, 1
      %p113 = por %p111, %p112
      %p114 = scmp.ne.s32.totalorder %s103, %s104
      %p115 = scmp.eq.s32.totalorder %s17, 0
      %p116 = por %p114, %p115
      %p117 = scmp.ne.s32.totalorder %s103, %s104
      %p118 = scmp.eq.s32.totalorder %s18, 1
      %p119 = por %p117, %p118
      %p121 = scmp.ne.s32.totalorder %s104, %s120
      %p122 = scmp.eq.s32.totalorder %s18, 0
      %p123 = por %p121, %p122
      %p124 = scmp.le.s32.totalorder 1, %s12
      %p125 = scmp.lt.s32.totalorder %s12, 3
      %p126 = pnand %p124, %p125
      %p127 = pneg %p126
      // Predicated region
      $region9: #{toy_ae_forward.1} parent=5 // pred_check
        _
      $region10: #{toy_ae_forward.1} parent=5 // pred_check_branch
        %129 = sbr.rel (%p126) target = $region12
      $region11: #{toy_ae_forward.1} parent=5 // pred_region
        %s130 = ssub.s32 %s12, 1
      $region12: #{toy_ae_forward.1} parent=5 // pred_fallthru
        _
      %p131 = scmp.lt.s32.totalorder %s12, 2
      // Predicated region
      $region13: #{toy_ae_forward.1} parent=5 // pred_check
        %p132 = pneg %p131
      $region14: #{toy_ae_forward.1} parent=5 // pred_check_branch
        %134 = sbr.rel (%p132) target = $region16
      $region15: #{toy_ae_forward.1} parent=5 // pred_region
        // Predicated region
        $region17: #{toy_ae_forward.1} parent=15 // pred_check
          %p135 = pneg %p32
        $region18: #{toy_ae_forward.1} parent=15 // pred_check_branch
          %137 = sbr.rel (%p135) target = $region20
        $region19: #{toy_ae_forward.1} parent=15 // pred_region
          %s138 = sand.u32 %s22, 1
          %s139 = scalar_lea.sflag [#allocation3], %s138
          %s140 = sand.u32 %s22, 1
          %s141 = smul.addr %s140, 512
          %s142 = scalar_lea.vmem [#allocation2], %s141
          %s144 = ssub.s32 8192, 8192
          %145 = vsyncadd %s139, %s144
          %s146 = smul.addr %s12, 64
          %s147 = smul.addr %s146, 128
          %s148 = scalar_lea.hbm %s0, %s147
          %s149 = sshll.u32 %s142, 4
          %s150 = int_to_ptr.vmem [resolvable:$true] %s149
          %155 = dma.hbm_to_vmem [thread:$0]  %s148, 8192, %s150, %s139, 128, 128, 8
        $region20: #{toy_ae_forward.1} parent=15 // pred_fallthru
          _
        // Predicated region
        $region21: #{toy_ae_forward.1} parent=15 // pred_check
          %p156 = pneg %p58
        $region22: #{toy_ae_forward.1} parent=15 // pred_check_branch
          %158 = sbr.rel (%p156) target = $region24
        $region23: #{toy_ae_forward.1} parent=15 // pred_region
          %p159 = scmp.lt.s32.totalorder %s12, 1
          %s160 = scalar_select %p159, %s12, 1
          %s161 = smul.addr %s160, 8
          %s162 = scalar_lea.vmem %s1, %s161
        $region24: #{toy_ae_forward.1} parent=15 // pred_fallthru
          _
        // Predicated region
        $region25: #{toy_ae_forward.1} parent=15 // pred_check
          %p163 = pneg %p84
        $region26: #{toy_ae_forward.1} parent=15 // pred_check_branch
          %165 = sbr.rel (%p163) target = $region28
        $region27: #{toy_ae_forward.1} parent=15 // pred_region
          %p166 = scmp.lt.s32.totalorder %s12, 1
          %s167 = scalar_select %p166, %s12, 1
          %s168 = smul.addr %s167, 2
          %s169 = smul.addr %s168, 8
          %s170 = scalar_lea.vmem %s2, %s169
        $region28: #{toy_ae_forward.1} parent=15 // pred_fallthru
          _
      $region16: #{toy_ae_forward.1} parent=5 // pred_fallthru
        _
      %p171 = scmp.le.s32.totalorder 1, %s12
      %p172 = scmp.lt.s32.totalorder %s12, 3
      %p173 = pnand %p171, %p172
      %p174 = pneg %p173
      // Predicated region
      $region29: #{toy_ae_forward.1} parent=5 // pred_check
        _
      $region30: #{toy_ae_forward.1} parent=5 // pred_check_branch
        %176 = sbr.rel (%p173) target = $region32
      $region31: #{toy_ae_forward.1} parent=5 // pred_region
        %s177 = ssub.s32 %s12, 1
        %s178 = sand.u32 %s25, 1
        %s179 = scalar_lea.sflag [#allocation3], %s178
        %s180 = sand.u32 %s25, 1
        %s181 = smul.addr %s180, 512
        %s182 = scalar_lea.vmem [#allocation2], %s181
        // Predicated region
        $region33: #{toy_ae_forward.1} parent=31 // pred_check
          %p183 = pneg %p38
        $region34: #{toy_ae_forward.1} parent=31 // pred_check_branch
          %185 = sbr.rel (%p183) target = $region36
        $region35: #{toy_ae_forward.1} parent=31 // pred_region
          %186 = dma.done %s179, 8192
        $region36: #{toy_ae_forward.1} parent=31 // pred_fallthru
          _
        %s187 = sand.u32 %s25, 1
        %s188 = scalar_lea.sflag [#allocation3], %s187
        %s189 = sand.u32 %s25, 1
        %s190 = smul.addr %s189, 512
        %s191 = scalar_lea.vmem [#allocation2], %s190
        %p192 = pneg %p38
        %p193 = pneg %p35
        %p194 = scmp.lt.s32.totalorder %s17, 1
        %s195 = scalar_select %p194, %s17, 1
        %s196 = smul.addr %s195, 8
        %s197 = scalar_lea.vmem %s1, %s196
        %p198 = pneg %p64
        %p199 = pneg %p61
        %p200 = scmp.lt.s32.totalorder %s17, 1
        %s201 = scalar_select %p200, %s17, 1
        %s202 = smul.addr %s201, 2
        %s203 = smul.addr %s202, 8
        %s204 = scalar_lea.vmem %s2, %s203
        %p205 = pneg %p90
        %p206 = pneg %p87
        %p207 = pneg %p116
        %p208 = pneg %p113
        %p209 = scmp.lt.s32.totalorder %s17, 1
        %s210 = scalar_select %p209, %s17, 1
        %s211 = smul.addr %s210, 8
        %s212 = scalar_lea.vmem %s3, %s211
        %p213 = scmp.lt.s32.totalorder %s17, 1
        %s214 = scalar_select %p213, %s17, 1
        %s215 = smul.addr %s214, 8
        %s216 = scalar_lea.vmem %s1, %s215
        %p217 = scmp.lt.s32.totalorder %s17, 1
        %s218 = scalar_select %p217, %s17, 1
        %s219 = smul.addr %s218, 2
        %s220 = smul.addr %s219, 8
        %s221 = scalar_lea.vmem %s2, %s220
        %p222 = scmp.lt.s32.totalorder %s17, 1
        %s223 = scalar_select %p222, %s17, 1
        %s224 = smul.addr %s223, 8
        %s225 = scalar_lea.vmem %s3, %s224
        %v226 = vld [vmem:[%s216] sm:$0x7f]
        %v227 = vld [vmem:[%s221] sm:$0xff]
        %s228 = scalar_lea.vmem %s221, 8
        %v229 = vld [vmem:[%s228] sm:$0xff]
        %p230 = scmp.eq.s32.totalorder %s17, 0
        // Predicated region
        $region37: #{toy_ae_forward.1} parent=31 // pred_check
          %p231 = pneg %p230
        $region38: #{toy_ae_forward.1} parent=31 // pred_check_branch
          %233 = sbr.rel (%p231) target = $region40
        $region39: #{toy_ae_forward.1} parent=31 // pred_region
          %v234 = vld [vmem:[%s182] sm:$0xff]
          %v235 = vld [vmem:[%s182 + $0x8] sm:$0xff]
          %v236 = vld [vmem:[%s182 + $0x10] sm:$0xff]
          %v237 = vld [vmem:[%s182 + $0x18] sm:$0xff]
          %v238 = vld [vmem:[%s182 + $0x20] sm:$0xff]
          %v239 = vld [vmem:[%s182 + $0x28] sm:$0xff]
          %v240 = vld [vmem:[%s182 + $0x30] sm:$0xff]
          %v241 = vld [vmem:[%s182 + $0x38] sm:$0xff]
          %v242 = vld [vmem:[%s182 + $0x40] sm:$0xff]
          %v243 = vld [vmem:[%s182 + $0x48] sm:$0xff]
          %v244 = vld [vmem:[%s182 + $0x50] sm:$0xff]
          %v245 = vld [vmem:[%s182 + $0x58] sm:$0xff]
          %v246 = vld [vmem:[%s182 + $0x60] sm:$0xff]
          %v247 = vld [vmem:[%s182 + $0x68] sm:$0xff]
          %v248 = vld [vmem:[%s182 + $0x70] sm:$0xff]
          %v249 = vld [vmem:[%s182 + $0x78] sm:$0xff]
          %250 = vmatprep.subr.mxu0 0.0
          %251 = vmatpush1.msra.mxu0 %v234
          %252 = vmatprep.subr.mxu0 0.0
          %253 = vmatpush1.msra.mxu0 %v235
          %254 = vmatprep.subr.mxu0 0.0
          %255 = vmatpush1.msra.mxu0 %v236
          %256 = vmatprep.subr.mxu0 0.0
          %257 = vmatpush1.msra.mxu0 %v237
          %258 = vmatprep.subr.mxu0 0.0
          %259 = vmatpush1.msra.mxu0 %v238
          %260 = vmatprep.subr.mxu0 0.0
          %261 = vmatpush1.msra.mxu0 %v239
          %262 = vmatprep.subr.mxu0 0.0
          %263 = vmatpush1.msra.mxu0 %v240
          %264 = vmatprep.subr.mxu0 0.0
          %265 = vmatpush1.msra.mxu0 %v241
          %266 = vmatprep.subr.mxu0 0.0
          %267 = vmatpush1.msra.mxu0 %v242
          %268 = vmatprep.subr.mxu0 0.0
          %269 = vmatpush1.msra.mxu0 %v243
          %270 = vmatprep.subr.mxu0 0.0
          %271 = vmatpush1.msra.mxu0 %v244
          %272 = vmatprep.subr.mxu0 0.0
          %273 = vmatpush1.msra.mxu0 %v245
          %274 = vmatprep.subr.mxu0 0.0
          %275 = vmatpush1.msra.mxu0 %v246
          %276 = vmatprep.subr.mxu0 0.0
          %277 = vmatpush1.msra.mxu0 %v247
          %278 = vmatprep.subr.mxu0 0.0
          %279 = vmatpush1.msra.mxu0 %v248
          %280 = vmatprep.subr.mxu0 0.0
          %281 = vmatpush1.msra.mxu0 %v249
          %282 = vmatprep.subr.mxu0 0.0
          %283 = vmatpush1.msra.mxu0 0.0
          %284 = vmatprep.subr.mxu0 0.0
          %285 = vmatpush1.msra.mxu0 0.0
          %286 = vmatprep.subr.mxu0 0.0
          %287 = vmatpush1.msra.mxu0 0.0
          %288 = vmatprep.subr.mxu0 0.0
          %289 = vmatpush1.msra.mxu0 0.0
          %290 = vmatprep.subr.mxu0 0.0
          %291 = vmatpush1.msra.mxu0 0.0
          %292 = vmatprep.subr.mxu0 0.0
          %293 = vmatpush1.msra.mxu0 0.0
          %294 = vmatprep.subr.mxu0 0.0
          %295 = vmatpush1.msra.mxu0 0.0
          %296 = vmatprep.subr.mxu0 0.0
          %297 = vmatpush1.msra.mxu0 0.0
          %298 = vmatprep.subr.mxu0 0.0
          %299 = vmatpush1.msra.mxu0 0.0
          %300 = vmatprep.subr.mxu0 0.0
          %301 = vmatpush1.msra.mxu0 0.0
          %302 = vmatprep.subr.mxu0 0.0
          %303 = vmatpush1.msra.mxu0 0.0
          %304 = vmatprep.subr.mxu0 0.0
          %305 = vmatpush1.msra.mxu0 0.0
          %306 = vmatprep.subr.mxu0 0.0
          %307 = vmatpush1.msra.mxu0 0.0
          %308 = vmatprep.subr.mxu0 0.0
          %309 = vmatpush1.msra.mxu0 0.0
          %310 = vmatprep.subr.mxu0 0.0
          %311 = vmatpush1.msra.mxu0 0.0
          %312 = vmatprep.subr.mxu0 0.0
          %313 = vmatpush1.msra.mxu0 0.0
          %314 = vmatprep.mubr.f32.mxu0 0.0
          %315 = vmatmul.mubr.f32.gmra.mrb[0].mxu0 %v227
          %v316 = vpop.f32.mrb[0].mxu0
          %v317 = vadd.f32 0.0, %v316
          %v318 = vpop.f32.mrb[0].mxu0
          %319 = vdwg.mxu0
          %v320 = vrot.slane %v317, 4
          %v321 = vadd.f32 %v317, %v320
          %v322 = vrot.slane %v321, 2
          %v323 = vadd.f32 %v321, %v322
          %v324 = vrot.slane %v323, 1
          %v325 = vadd.f32 %v323, %v324
          %v326 = vrcp.pop 8.0
          %v327 = vmul.f32 %v325, %v326
          %v328 = vmul.f32 %v317, %v317
          %v329 = vrot.slane %v328, 4
          %v330 = vadd.f32 %v328, %v329
          %v331 = vrot.slane %v330, 2
          %v332 = vadd.f32 %v330, %v331
          %v333 = vrot.slane %v332, 1
          %v334 = vadd.f32 %v332, %v333
          %v335 = vmul.f32 %v334, %v326
          %v336 = vmul.f32 %v327, %v327
          %v337 = vsub.f32 %v335, %v336
          %v338 = vmax.f32 %v337, 0.0
          %v339 = vadd.f32 %v338, 1e-05
          %v340 = vrsqrt.pop %v339
          %v341 = vmul.f32 %v226, %v340
          %v342 = vmul.f32 %v327, %v341
          %v344 = vrot.slane %v342, 7
          %v346 = vsub.f32 %v226, %v344
          %v347 = vlaneseq
          %v348 = vshrl.u32 %v347, 7
          %v349 = vsub.s32 0, %v348
          %v350 = vrot.slane %v341, %v349
          %v351 = vmul.f32 %v317, %v350
          %v352 = vlaneseq
          %v353 = vshrl.u32 %v352, 7
          %v354 = vsub.s32 1, %v353
          %v355 = vrot.slane %v346, %v354
          %v356 = vadd.f32 %v351, %v355
          %v357 = vmax.f32 %v356, 0.0
          %s358 = scalar_lea.vmem %s182, 128 [#allocation2]
          %v359 = vld [vmem:[%s358] sm:$0xff]
          %v360 = vld [vmem:[%s358 + $0x8] sm:$0xff]
          %v361 = vld [vmem:[%s358 + $0x10] sm:$0xff]
          %v362 = vld [vmem:[%s358 + $0x18] sm:$0xff]
          %v363 = vld [vmem:[%s358 + $0x20] sm:$0xff]
          %v364 = vld [vmem:[%s358 + $0x28] sm:$0xff]
          %v365 = vld [vmem:[%s358 + $0x30] sm:$0xff]
          %v366 = vld [vmem:[%s358 + $0x38] sm:$0xff]
          %v367 = vld [vmem:[%s358 + $0x40] sm:$0xff]
          %v368 = vld [vmem:[%s358 + $0x48] sm:$0xff]
          %v369 = vld [vmem:[%s358 + $0x50] sm:$0xff]
          %v370 = vld [vmem:[%s358 + $0x58] sm:$0xff]
          %v371 = vld [vmem:[%s358 + $0x60] sm:$0xff]
          %v372 = vld [vmem:[%s358 + $0x68] sm:$0xff]
          %v373 = vld [vmem:[%s358 + $0x70] sm:$0xff]
          %v374 = vld [vmem:[%s358 + $0x78] sm:$0xff]
          %375 = vmatprep.subr.mxu0 0.0
          %376 = vmatpush1.msra.mxu0 %v359
          %377 = vmatprep.subr.mxu0 0.0
          %378 = vmatpush1.msra.mxu0 %v360
          %379 = vmatprep.subr.mxu0 0.0
          %380 = vmatpush1.msra.mxu0 %v361
          %381 = vmatprep.subr.mxu0 0.0
          %382 = vmatpush1.msra.mxu0 %v362
          %383 = vmatprep.subr.mxu0 0.0
          %384 = vmatpush1.msra.mxu0 %v363
          %385 = vmatprep.subr.mxu0 0.0
          %386 = vmatpush1.msra.mxu0 %v364
          %387 = vmatprep.subr.mxu0 0.0
          %388 = vmatpush1.msra.mxu0 %v365
          %389 = vmatprep.subr.mxu0 0.0
          %390 = vmatpush1.msra.mxu0 %v366
          %391 = vmatprep.subr.mxu0 0.0
          %392 = vmatpush1.msra.mxu0 %v367
          %393 = vmatprep.subr.mxu0 0.0
          %394 = vmatpush1.msra.mxu0 %v368
          %395 = vmatprep.subr.mxu0 0.0
          %396 = vmatpush1.msra.mxu0 %v369
          %397 = vmatprep.subr.mxu0 0.0
          %398 = vmatpush1.msra.mxu0 %v370
          %399 = vmatprep.subr.mxu0 0.0
          %400 = vmatpush1.msra.mxu0 %v371
          %401 = vmatprep.subr.mxu0 0.0
          %402 = vmatpush1.msra.mxu0 %v372
          %403 = vmatprep.subr.mxu0 0.0
          %404 = vmatpush1.msra.mxu0 %v373
          %405 = vmatprep.subr.mxu0 0.0
          %406 = vmatpush1.msra.mxu0 %v374
          %407 = vmatprep.subr.mxu0 0.0
          %408 = vmatpush1.msra.mxu0 0.0
          %409 = vmatprep.subr.mxu0 0.0
          %410 = vmatpush1.msra.mxu0 0.0
          %411 = vmatprep.subr.mxu0 0.0
          %412 = vmatpush1.msra.mxu0 0.0
          %413 = vmatprep.subr.mxu0 0.0
          %414 = vmatpush1.msra.mxu0 0.0
          %415 = vmatprep.subr.mxu0 0.0
          %416 = vmatpush1.msra.mxu0 0.0
          %417 = vmatprep.subr.mxu0 0.0
          %418 = vmatpush1.msra.mxu0 0.0
          %419 = vmatprep.subr.mxu0 0.0
          %420 = vmatpush1.msra.mxu0 0.0
          %421 = vmatprep.subr.mxu0 0.0
          %422 = vmatpush1.msra.mxu0 0.0
          %423 = vmatprep.subr.mxu0 0.0
          %424 = vmatpush1.msra.mxu0 0.0
          %425 = vmatprep.subr.mxu0 0.0
          %426 = vmatpush1.msra.mxu0 0.0
          %427 = vmatprep.subr.mxu0 0.0
          %428 = vmatpush1.msra.mxu0 0.0
          %429 = vmatprep.subr.mxu0 0.0
          %430 = vmatpush1.msra.mxu0 0.0
          %431 = vmatprep.subr.mxu0 0.0
          %432 = vmatpush1.msra.mxu0 0.0
          %433 = vmatprep.subr.mxu0 0.0
          %434 = vmatpush1.msra.mxu0 0.0
          %435 = vmatprep.subr.mxu0 0.0
          %436 = vmatpush1.msra.mxu0 0.0
          %437 = vmatprep.subr.mxu0 0.0
          %438 = vmatpush1.msra.mxu0 0.0
          %439 = vmatprep.mubr.f32.mxu0 0.0
          %440 = vmatmul.mubr.f32.gmra.mrb[0].mxu0 %v357
          %v441 = vpop.f32.mrb[0].mxu0
          %v442 = vadd.f32 0.0, %v441
          %v443 = vpop.f32.mrb[0].mxu0
          %444 = vdwg.mxu0
          %v445 = vrot.slane %v442, 4
          %v446 = vadd.f32 %v442, %v445
          %v447 = vrot.slane %v446, 2
          %v448 = vadd.f32 %v446, %v447
          %v449 = vrot.slane %v448, 1
          %v450 = vadd.f32 %v448, %v449
          %v451 = vmul.f32 %v450, %v326
          %v452 = vmul.f32 %v442, %v442
          %v453 = vrot.slane %v452, 4
          %v454 = vadd.f32 %v452, %v453
          %v455 = vrot.slane %v454, 2
          %v456 = vadd.f32 %v454, %v455
          %v457 = vrot.slane %v456, 1
          %v458 = vadd.f32 %v456, %v457
          %v459 = vmul.f32 %v458, %v326
          %v460 = vmul.f32 %v451, %v451
          %v461 = vsub.f32 %v459, %v460
          %v462 = vmax.f32 %v461, 0.0
          %v463 = vadd.f32 %v462, 1e-05
          %v464 = vrsqrt.pop %v463
          %v465 = vmul.f32 %v226, %v464
          %v466 = vmul.f32 %v451, %v465
          %v468 = vrot.slane %v466, 7
          %v470 = vsub.f32 %v226, %v468
          %v471 = vlaneseq
          %v472 = vshrl.u32 %v471, 7
          %v473 = vsub.s32 2, %v472
          %v474 = vrot.slane %v465, %v473
          %v475 = vmul.f32 %v442, %v474
          %v476 = vlaneseq
          %v477 = vshrl.u32 %v476, 7
          %v478 = vsub.s32 3, %v477
          %v479 = vrot.slane %v470, %v478
          %v480 = vadd.f32 %v475, %v479
          %v481 = vmax.f32 %v480, 0.0
          %s482 = scalar_lea.vmem %s182, 256 [#allocation2]
          %v483 = vld [vmem:[%s482] sm:$0xff]
          %v484 = vld [vmem:[%s482 + $0x8] sm:$0xff]
          %v485 = vld [vmem:[%s482 + $0x10] sm:$0xff]
          %v486 = vld [vmem:[%s482 + $0x18] sm:$0xff]
          %v487 = vld [vmem:[%s482 + $0x20] sm:$0xff]
          %v488 = vld [vmem:[%s482 + $0x28] sm:$0xff]
          %v489 = vld [vmem:[%s482 + $0x30] sm:$0xff]
          %v490 = vld [vmem:[%s482 + $0x38] sm:$0xff]
          %v491 = vld [vmem:[%s482 + $0x40] sm:$0xff]
          %v492 = vld [vmem:[%s482 + $0x48] sm:$0xff]
          %v493 = vld [vmem:[%s482 + $0x50] sm:$0xff]
          %v494 = vld [vmem:[%s482 + $0x58] sm:$0xff]
          %v495 = vld [vmem:[%s482 + $0x60] sm:$0xff]
          %v496 = vld [vmem:[%s482 + $0x68] sm:$0xff]
          %v497 = vld [vmem:[%s482 + $0x70] sm:$0xff]
          %v498 = vld [vmem:[%s482 + $0x78] sm:$0xff]
          %499 = vmatprep.subr.mxu0 0.0
          %500 = vmatpush1.msra.mxu0 %v483
          %501 = vmatprep.subr.mxu0 0.0
          %502 = vmatpush1.msra.mxu0 %v484
          %503 = vmatprep.subr.mxu0 0.0
          %504 = vmatpush1.msra.mxu0 %v485
          %505 = vmatprep.subr.mxu0 0.0
          %506 = vmatpush1.msra.mxu0 %v486
          %507 = vmatprep.subr.mxu0 0.0
          %508 = vmatpush1.msra.mxu0 %v487
          %509 = vmatprep.subr.mxu0 0.0
          %510 = vmatpush1.msra.mxu0 %v488
          %511 = vmatprep.subr.mxu0 0.0
          %512 = vmatpush1.msra.mxu0 %v489
          %513 = vmatprep.subr.mxu0 0.0
          %514 = vmatpush1.msra.mxu0 %v490
          %515 = vmatprep.subr.mxu0 0.0
          %516 = vmatpush1.msra.mxu0 %v491
          %517 = vmatprep.subr.mxu0 0.0
          %518 = vmatpush1.msra.mxu0 %v492
          %519 = vmatprep.subr.mxu0 0.0
          %520 = vmatpush1.msra.mxu0 %v493
          %521 = vmatprep.subr.mxu0 0.0
          %522 = vmatpush1.msra.mxu0 %v494
          %523 = vmatprep.subr.mxu0 0.0
          %524 = vmatpush1.msra.mxu0 %v495
          %525 = vmatprep.subr.mxu0 0.0
          %526 = vmatpush1.msra.mxu0 %v496
          %527 = vmatprep.subr.mxu0 0.0
          %528 = vmatpush1.msra.mxu0 %v497
          %529 = vmatprep.subr.mxu0 0.0
          %530 = vmatpush1.msra.mxu0 %v498
          %531 = vmatprep.subr.mxu0 0.0
          %532 = vmatpush1.msra.mxu0 0.0
          %533 = vmatprep.subr.mxu0 0.0
          %534 = vmatpush1.msra.mxu0 0.0
          %535 = vmatprep.subr.mxu0 0.0
          %536 = vmatpush1.msra.mxu0 0.0
          %537 = vmatprep.subr.mxu0 0.0
          %538 = vmatpush1.msra.mxu0 0.0
          %539 = vmatprep.subr.mxu0 0.0
          %540 = vmatpush1.msra.mxu0 0.0
          %541 = vmatprep.subr.mxu0 0.0
          %542 = vmatpush1.msra.mxu0 0.0
          %543 = vmatprep.subr.mxu0 0.0
          %544 = vmatpush1.msra.mxu0 0.0
          %545 = vmatprep.subr.mxu0 0.0
          %546 = vmatpush1.msra.mxu0 0.0
          %547 = vmatprep.subr.mxu0 0.0
          %548 = vmatpush1.msra.mxu0 0.0
          %549 = vmatprep.subr.mxu0 0.0
          %550 = vmatpush1.msra.mxu0 0.0
          %551 = vmatprep.subr.mxu0 0.0
          %552 = vmatpush1.msra.mxu0 0.0
          %553 = vmatprep.subr.mxu0 0.0
          %554 = vmatpush1.msra.mxu0 0.0
          %555 = vmatprep.subr.mxu0 0.0
          %556 = vmatpush1.msra.mxu0 0.0
          %557 = vmatprep.subr.mxu0 0.0
          %558 = vmatpush1.msra.mxu0 0.0
          %559 = vmatprep.subr.mxu0 0.0
          %560 = vmatpush1.msra.mxu0 0.0
          %561 = vmatprep.subr.mxu0 0.0
          %562 = vmatpush1.msra.mxu0 0.0
          %563 = vmatprep.mubr.f32.mxu0 0.0
          %564 = vmatmul.mubr.f32.gmra.mrb[0].mxu0 %v481
          %v565 = vpop.f32.mrb[0].mxu0
          %v566 = vadd.f32 0.0, %v565
          %v567 = vpop.f32.mrb[0].mxu0
          %568 = vdwg.mxu0
          %v569 = vrot.slane %v566, 4
          %v570 = vadd.f32 %v566, %v569
          %v571 = vrot.slane %v570, 2
          %v572 = vadd.f32 %v570, %v571
          %v573 = vrot.slane %v572, 1
          %v574 = vadd.f32 %v572, %v573
          %v575 = vmul.f32 %v574, %v326
          %v576 = vmul.f32 %v566, %v566
          %v577 = vrot.slane %v576, 4
          %v578 = vadd.f32 %v576, %v577
          %v579 = vrot.slane %v578, 2
          %v580 = vadd.f32 %v578, %v579
          %v581 = vrot.slane %v580, 1
          %v582 = vadd.f32 %v580, %v581
          %v583 = vmul.f32 %v582, %v326
          %v584 = vmul.f32 %v575, %v575
          %v585 = vsub.f32 %v583, %v584
          %v586 = vmax.f32 %v585, 0.0
          %v587 = vadd.f32 %v586, 1e-05
          %v588 = vrsqrt.pop %v587
          %v589 = vmul.f32 %v226, %v588
          %v590 = vmul.f32 %v575, %v589
          %v592 = vrot.slane %v590, 7
          %v594 = vsub.f32 %v226, %v592
          %v595 = vlaneseq
          %v596 = vshrl.u32 %v595, 7
          %v597 = vsub.s32 4, %v596
          %v598 = vrot.slane %v589, %v597
          %v599 = vmul.f32 %v566, %v598
          %v600 = vlaneseq
          %v601 = vshrl.u32 %v600, 7
          %v602 = vsub.s32 5, %v601
          %v603 = vrot.slane %v594, %v602
          %v604 = vadd.f32 %v599, %v603
          %v605 = vmax.f32 %v604, 0.0
          %s606 = scalar_lea.vmem %s182, 384 [#allocation2]
          %v607 = vld [vmem:[%s606] sm:$0xff]
          %v608 = vld [vmem:[%s606 + $0x8] sm:$0xff]
          %v609 = vld [vmem:[%s606 + $0x10] sm:$0xff]
          %v610 = vld [vmem:[%s606 + $0x18] sm:$0xff]
          %v611 = vld [vmem:[%s606 + $0x20] sm:$0xff]
          %v612 = vld [vmem:[%s606 + $0x28] sm:$0xff]
          %v613 = vld [vmem:[%s606 + $0x30] sm:$0xff]
          %v614 = vld [vmem:[%s606 + $0x38] sm:$0xff]
          %v615 = vld [vmem:[%s606 + $0x40] sm:$0xff]
          %v616 = vld [vmem:[%s606 + $0x48] sm:$0xff]
          %v617 = vld [vmem:[%s606 + $0x50] sm:$0xff]
          %v618 = vld [vmem:[%s606 + $0x58] sm:$0xff]
          %v619 = vld [vmem:[%s606 + $0x60] sm:$0xff]
          %v620 = vld [vmem:[%s606 + $0x68] sm:$0xff]
          %v621 = vld [vmem:[%s606 + $0x70] sm:$0xff]
          %v622 = vld [vmem:[%s606 + $0x78] sm:$0xff]
          %v623 = vlaneseq
          %v624 = vshrl.u32 %v623, 7
          %v625 = vsub.s32 6, %v624
          %v626 = vrot.slane %v226, %v625
          %627 = vmatprep.subr.mxu0 0.0
          %628 = vmatpush1.msra.mxu0 %v607
          %629 = vmatprep.subr.mxu0 0.0
          %630 = vmatpush1.msra.mxu0 %v608
          %631 = vmatprep.subr.mxu0 0.0
          %632 = vmatpush1.msra.mxu0 %v609
          %633 = vmatprep.subr.mxu0 0.0
          %634 = vmatpush1.msra.mxu0 %v610
          %635 = vmatprep.subr.mxu0 0.0
          %636 = vmatpush1.msra.mxu0 %v611
          %637 = vmatprep.subr.mxu0 0.0
          %638 = vmatpush1.msra.mxu0 %v612
          %639 = vmatprep.subr.mxu0 0.0
          %640 = vmatpush1.msra.mxu0 %v613
          %641 = vmatprep.subr.mxu0 0.0
          %642 = vmatpush1.msra.mxu0 %v614
          %643 = vmatprep.subr.mxu0 0.0
          %644 = vmatpush1.msra.mxu0 %v615
          %645 = vmatprep.subr.mxu0 0.0
          %646 = vmatpush1.msra.mxu0 %v616
          %647 = vmatprep.subr.mxu0 0.0
          %648 = vmatpush1.msra.mxu0 %v617
          %649 = vmatprep.subr.mxu0 0.0
          %650 = vmatpush1.msra.mxu0 %v618
          %651 = vmatprep.subr.mxu0 0.0
          %652 = vmatpush1.msra.mxu0 %v619
          %653 = vmatprep.subr.mxu0 0.0
          %654 = vmatpush1.msra.mxu0 %v620
          %655 = vmatprep.subr.mxu0 0.0
          %656 = vmatpush1.msra.mxu0 %v621
          %657 = vmatprep.subr.mxu0 0.0
          %658 = vmatpush1.msra.mxu0 %v622
          %659 = vmatprep.subr.mxu0 0.0
          %660 = vmatpush1.msra.mxu0 0.0
          %661 = vmatprep.subr.mxu0 0.0
          %662 = vmatpush1.msra.mxu0 0.0
          %663 = vmatprep.subr.mxu0 0.0
          %664 = vmatpush1.msra.mxu0 0.0
          %665 = vmatprep.subr.mxu0 0.0
          %666 = vmatpush1.msra.mxu0 0.0
          %667 = vmatprep.subr.mxu0 0.0
          %668 = vmatpush1.msra.mxu0 0.0
          %669 = vmatprep.subr.mxu0 0.0
          %670 = vmatpush1.msra.mxu0 0.0
          %671 = vmatprep.subr.mxu0 0.0
          %672 = vmatpush1.msra.mxu0 0.0
          %673 = vmatprep.subr.mxu0 0.0
          %674 = vmatpush1.msra.mxu0 0.0
          %675 = vmatprep.subr.mxu0 0.0
          %676 = vmatpush1.msra.mxu0 0.0
          %677 = vmatprep.subr.mxu0 0.0
          %678 = vmatpush1.msra.mxu0 0.0
          %679 = vmatprep.subr.mxu0 0.0
          %680 = vmatpush1.msra.mxu0 0.0
          %681 = vmatprep.subr.mxu0 0.0
          %682 = vmatpush1.msra.mxu0 0.0
          %683 = vmatprep.subr.mxu0 0.0
          %684 = vmatpush1.msra.mxu0 0.0
          %685 = vmatprep.subr.mxu0 0.0
          %686 = vmatpush1.msra.mxu0 0.0
          %687 = vmatprep.subr.mxu0 0.0
          %688 = vmatpush1.msra.mxu0 0.0
          %689 = vmatprep.subr.mxu0 0.0
          %690 = vmatpush1.msra.mxu0 0.0
          %691 = vmatprep.mubr.f32.mxu0 0.0
          %692 = vmatmul.mubr.f32.gmra.mrb[0].mxu0 %v605
          %v693 = vpop.f32.mrb[0].mxu0
          %v694 = vadd.f32 %v626, %v693
          %v695 = vpop.f32.mrb[0].mxu0
          %696 = vdwg.mxu0
          %697 = vrot.lane.b32.xlu0 %v694, 64
          %v698 = vpop.permute.xlu0 %697
          %v699 = vmul.f32 %v698, 0.5
          %v700 = vmul.f32 %v699, 1.442695
          %v701 = vpow.pop %v700
          %v702 = vmul.f32 %v701, %v229
          %v703 = vadd.f32 %v694, %v702
          %704 = vst [vmem:[%s225] sm:$0xff] %v703
        $region40: #{toy_ae_forward.1} parent=31 // pred_fallthru
          _
        %p705 = scmp.eq.s32.totalorder %s17, 1
        // Predicated region
        $region41: #{toy_ae_forward.1} parent=31 // pred_check
          %p706 = pneg %p705
        $region42: #{toy_ae_forward.1} parent=31 // pred_check_branch
          %708 = sbr.rel (%p706) target = $region44
        $region43: #{toy_ae_forward.1} parent=31 // pred_region
          %v709 = vld [vmem:[%s182] sm:$0xff]
          %v710 = vld [vmem:[%s182 + $0x8] sm:$0xff]
          %v711 = vld [vmem:[%s182 + $0x10] sm:$0xff]
          %v712 = vld [vmem:[%s182 + $0x18] sm:$0xff]
          %v713 = vld [vmem:[%s182 + $0x20] sm:$0xff]
          %v714 = vld [vmem:[%s182 + $0x28] sm:$0xff]
          %v715 = vld [vmem:[%s182 + $0x30] sm:$0xff]
          %v716 = vld [vmem:[%s182 + $0x38] sm:$0xff]
          %v717 = vld [vmem:[%s182 + $0x40] sm:$0xff]
          %v718 = vld [vmem:[%s182 + $0x48] sm:$0xff]
          %v719 = vld [vmem:[%s182 + $0x50] sm:$0xff]
          %v720 = vld [vmem:[%s182 + $0x58] sm:$0xff]
          %v721 = vld [vmem:[%s182 + $0x60] sm:$0xff]
          %v722 = vld [vmem:[%s182 + $0x68] sm:$0xff]
          %v723 = vld [vmem:[%s182 + $0x70] sm:$0xff]
          %v724 = vld [vmem:[%s182 + $0x78] sm:$0xff]
          %725 = vmatprep.subr.mxu0 0.0
          %726 = vmatpush1.msra.mxu0 %v709
          %727 = vmatprep.subr.mxu0 0.0
          %728 = vmatpush1.msra.mxu0 %v710
          %729 = vmatprep.subr.mxu0 0.0
          %730 = vmatpush1.msra.mxu0 %v711
          %731 = vmatprep.subr.mxu0 0.0
          %732 = vmatpush1.msra.mxu0 %v712
          %733 = vmatprep.subr.mxu0 0.0
          %734 = vmatpush1.msra.mxu0 %v713
          %735 = vmatprep.subr.mxu0 0.0
          %736 = vmatpush1.msra.mxu0 %v714
          %737 = vmatprep.subr.mxu0 0.0
          %738 = vmatpush1.msra.mxu0 %v715
          %739 = vmatprep.subr.mxu0 0.0
          %740 = vmatpush1.msra.mxu0 %v716
          %741 = vmatprep.subr.mxu0 0.0
          %742 = vmatpush1.msra.mxu0 %v717
          %743 = vmatprep.subr.mxu0 0.0
          %744 = vmatpush1.msra.mxu0 %v718
          %745 = vmatprep.subr.mxu0 0.0
          %746 = vmatpush1.msra.mxu0 %v719
          %747 = vmatprep.subr.mxu0 0.0
          %748 = vmatpush1.msra.mxu0 %v720
          %749 = vmatprep.subr.mxu0 0.0
          %750 = vmatpush1.msra.mxu0 %v721
          %751 = vmatprep.subr.mxu0 0.0
          %752 = vmatpush1.msra.mxu0 %v722
          %753 = vmatprep.subr.mxu0 0.0
          %754 = vmatpush1.msra.mxu0 %v723
          %755 = vmatprep.subr.mxu0 0.0
          %756 = vmatpush1.msra.mxu0 %v724
          %757 = vmatprep.subr.mxu0 0.0
          %758 = vmatpush1.msra.mxu0 0.0
          %759 = vmatprep.subr.mxu0 0.0
          %760 = vmatpush1.msra.mxu0 0.0
          %761 = vmatprep.subr.mxu0 0.0
          %762 = vmatpush1.msra.mxu0 0.0
          %763 = vmatprep.subr.mxu0 0.0
          %764 = vmatpush1.msra.mxu0 0.0
          %765 = vmatprep.subr.mxu0 0.0
          %766 = vmatpush1.msra.mxu0 0.0
          %767 = vmatprep.subr.mxu0 0.0
          %768 = vmatpush1.msra.mxu0 0.0
          %769 = vmatprep.subr.mxu0 0.0
          %770 = vmatpush1.msra.mxu0 0.0
          %771 = vmatprep.subr.mxu0 0.0
          %772 = vmatpush1.msra.mxu0 0.0
          %773 = vmatprep.subr.mxu0 0.0
          %774 = vmatpush1.msra.mxu0 0.0
          %775 = vmatprep.subr.mxu0 0.0
          %776 = vmatpush1.msra.mxu0 0.0
          %777 = vmatprep.subr.mxu0 0.0
          %778 = vmatpush1.msra.mxu0 0.0
          %779 = vmatprep.subr.mxu0 0.0
          %780 = vmatpush1.msra.mxu0 0.0
          %781 = vmatprep.subr.mxu0 0.0
          %782 = vmatpush1.msra.mxu0 0.0
          %783 = vmatprep.subr.mxu0 0.0
          %784 = vmatpush1.msra.mxu0 0.0
          %785 = vmatprep.subr.mxu0 0.0
          %786 = vmatpush1.msra.mxu0 0.0
          %787 = vmatprep.subr.mxu0 0.0
          %788 = vmatpush1.msra.mxu0 0.0
          %789 = vmatprep.mubr.f32.mxu0 0.0
          %790 = vmatmul.mubr.f32.gmra.mrb[0].mxu0 %v227
          %v791 = vpop.f32.mrb[0].mxu0
          %v792 = vadd.f32 0.0, %v791
          %v793 = vpop.f32.mrb[0].mxu0
          %794 = vdwg.mxu0
          %v795 = vrot.slane %v792, 4
          %v796 = vadd.f32 %v792, %v795
          %v797 = vrot.slane %v796, 2
          %v798 = vadd.f32 %v796, %v797
          %v799 = vrot.slane %v798, 1
          %v800 = vadd.f32 %v798, %v799
          %v801 = vrcp.pop 8.0
          %v802 = vmul.f32 %v800, %v801
          %v803 = vmul.f32 %v792, %v792
          %v804 = vrot.slane %v803, 4
          %v805 = vadd.f32 %v803, %v804
          %v806 = vrot.slane %v805, 2
          %v807 = vadd.f32 %v805, %v806
          %v808 = vrot.slane %v807, 1
          %v809 = vadd.f32 %v807, %v808
          %v810 = vmul.f32 %v809, %v801
          %v811 = vmul.f32 %v802, %v802
          %v812 = vsub.f32 %v810, %v811
          %v813 = vmax.f32 %v812, 0.0
          %v814 = vadd.f32 %v813, 1e-05
          %v815 = vrsqrt.pop %v814
          %v816 = vmul.f32 %v226, %v815
          %v817 = vmul.f32 %v802, %v816
          %v819 = vrot.slane %v817, 7
          %v821 = vsub.f32 %v226, %v819
          %v822 = vlaneseq
          %v823 = vshrl.u32 %v822, 7
          %v824 = vsub.s32 0, %v823
          %v825 = vrot.slane %v816, %v824
          %v826 = vmul.f32 %v792, %v825
          %v827 = vlaneseq
          %v828 = vshrl.u32 %v827, 7
          %v829 = vsub.s32 1, %v828
          %v830 = vrot.slane %v821, %v829
          %v831 = vadd.f32 %v826, %v830
          %v832 = vmax.f32 %v831, 0.0
          %s833 = scalar_lea.vmem %s182, 128 [#allocation2]
          %v834 = vld [vmem:[%s833] sm:$0xff]
          %v835 = vld [vmem:[%s833 + $0x8] sm:$0xff]
          %v836 = vld [vmem:[%s833 + $0x10] sm:$0xff]
          %v837 = vld [vmem:[%s833 + $0x18] sm:$0xff]
          %v838 = vld [vmem:[%s833 + $0x20] sm:$0xff]
          %v839 = vld [vmem:[%s833 + $0x28] sm:$0xff]
          %v840 = vld [vmem:[%s833 + $0x30] sm:$0xff]
          %v841 = vld [vmem:[%s833 + $0x38] sm:$0xff]
          %v842 = vld [vmem:[%s833 + $0x40] sm:$0xff]
          %v843 = vld [vmem:[%s833 + $0x48] sm:$0xff]
          %v844 = vld [vmem:[%s833 + $0x50] sm:$0xff]
          %v845 = vld [vmem:[%s833 + $0x58] sm:$0xff]
          %v846 = vld [vmem:[%s833 + $0x60] sm:$0xff]
          %v847 = vld [vmem:[%s833 + $0x68] sm:$0xff]
          %v848 = vld [vmem:[%s833 + $0x70] sm:$0xff]
          %v849 = vld [vmem:[%s833 + $0x78] sm:$0xff]
          %850 = vmatprep.subr.mxu0 0.0
          %851 = vmatpush1.msra.mxu0 %v834
          %852 = vmatprep.subr.mxu0 0.0
          %853 = vmatpush1.msra.mxu0 %v835
          %854 = vmatprep.subr.mxu0 0.0
          %855 = vmatpush1.msra.mxu0 %v836
          %856 = vmatprep.subr.mxu0 0.0
          %857 = vmatpush1.msra.mxu0 %v837
          %858 = vmatprep.subr.mxu0 0.0
          %859 = vmatpush1.msra.mxu0 %v838
          %860 = vmatprep.subr.mxu0 0.0
          %861 = vmatpush1.msra.mxu0 %v839
          %862 = vmatprep.subr.mxu0 0.0
          %863 = vmatpush1.msra.mxu0 %v840
          %864 = vmatprep.subr.mxu0 0.0
          %865 = vmatpush1.msra.mxu0 %v841
          %866 = vmatprep.subr.mxu0 0.0
          %867 = vmatpush1.msra.mxu0 %v842
          %868 = vmatprep.subr.mxu0 0.0
          %869 = vmatpush1.msra.mxu0 %v843
          %870 = vmatprep.subr.mxu0 0.0
          %871 = vmatpush1.msra.mxu0 %v844
          %872 = vmatprep.subr.mxu0 0.0
          %873 = vmatpush1.msra.mxu0 %v845
          %874 = vmatprep.subr.mxu0 0.0
          %875 = vmatpush1.msra.mxu0 %v846
          %876 = vmatprep.subr.mxu0 0.0
          %877 = vmatpush1.msra.mxu0 %v847
          %878 = vmatprep.subr.mxu0 0.0
          %879 = vmatpush1.msra.mxu0 %v848
          %880 = vmatprep.subr.mxu0 0.0
          %881 = vmatpush1.msra.mxu0 %v849
          %882 = vmatprep.subr.mxu0 0.0
          %883 = vmatpush1.msra.mxu0 0.0
          %884 = vmatprep.subr.mxu0 0.0
          %885 = vmatpush1.msra.mxu0 0.0
          %886 = vmatprep.subr.mxu0 0.0
          %887 = vmatpush1.msra.mxu0 0.0
          %888 = vmatprep.subr.mxu0 0.0
          %889 = vmatpush1.msra.mxu0 0.0
          %890 = vmatprep.subr.mxu0 0.0
          %891 = vmatpush1.msra.mxu0 0.0
          %892 = vmatprep.subr.mxu0 0.0
          %893 = vmatpush1.msra.mxu0 0.0
          %894 = vmatprep.subr.mxu0 0.0
          %895 = vmatpush1.msra.mxu0 0.0
          %896 = vmatprep.subr.mxu0 0.0
          %897 = vmatpush1.msra.mxu0 0.0
          %898 = vmatprep.subr.mxu0 0.0
          %899 = vmatpush1.msra.mxu0 0.0
          %900 = vmatprep.subr.mxu0 0.0
          %901 = vmatpush1.msra.mxu0 0.0
          %902 = vmatprep.subr.mxu0 0.0
          %903 = vmatpush1.msra.mxu0 0.0
          %904 = vmatprep.subr.mxu0 0.0
          %905 = vmatpush1.msra.mxu0 0.0
          %906 = vmatprep.subr.mxu0 0.0
          %907 = vmatpush1.msra.mxu0 0.0
          %908 = vmatprep.subr.mxu0 0.0
          %909 = vmatpush1.msra.mxu0 0.0
          %910 = vmatprep.subr.mxu0 0.0
          %911 = vmatpush1.msra.mxu0 0.0
          %912 = vmatprep.subr.mxu0 0.0
          %913 = vmatpush1.msra.mxu0 0.0
          %914 = vmatprep.mubr.f32.mxu0 0.0
          %915 = vmatmul.mubr.f32.gmra.mrb[0].mxu0 %v832
          %v916 = vpop.f32.mrb[0].mxu0
          %v917 = vadd.f32 0.0, %v916
          %v918 = vpop.f32.mrb[0].mxu0
          %919 = vdwg.mxu0
          %v920 = vrot.slane %v917, 4
          %v921 = vadd.f32 %v917, %v920
          %v922 = vrot.slane %v921, 2
          %v923 = vadd.f32 %v921, %v922
          %v924 = vrot.slane %v923, 1
          %v925 = vadd.f32 %v923, %v924
          %v926 = vmul.f32 %v925, %v801
          %v927 = vmul.f32 %v917, %v917
          %v928 = vrot.slane %v927, 4
          %v929 = vadd.f32 %v927, %v928
          %v930 = vrot.slane %v929, 2
          %v931 = vadd.f32 %v929, %v930
          %v932 = vrot.slane %v931, 1
          %v933 = vadd.f32 %v931, %v932
          %v934 = vmul.f32 %v933, %v801
          %v935 = vmul.f32 %v926, %v926
          %v936 = vsub.f32 %v934, %v935
          %v937 = vmax.f32 %v936, 0.0
          %v938 = vadd.f32 %v937, 1e-05
          %v939 = vrsqrt.pop %v938
          %v940 = vmul.f32 %v226, %v939
          %v941 = vmul.f32 %v926, %v940
          %v943 = vrot.slane %v941, 7
          %v945 = vsub.f32 %v226, %v943
          %v946 = vlaneseq
          %v947 = vshrl.u32 %v946, 7
          %v948 = vsub.s32 2, %v947
          %v949 = vrot.slane %v940, %v948
          %v950 = vmul.f32 %v917, %v949
          %v951 = vlaneseq
          %v952 = vshrl.u32 %v951, 7
          %v953 = vsub.s32 3, %v952
          %v954 = vrot.slane %v945, %v953
          %v955 = vadd.f32 %v950, %v954
          %v956 = vmax.f32 %v955, 0.0
          %s957 = scalar_lea.vmem %s182, 256 [#allocation2]
          %v958 = vld [vmem:[%s957] sm:$0xff]
          %v959 = vld [vmem:[%s957 + $0x8] sm:$0xff]
          %v960 = vld [vmem:[%s957 + $0x10] sm:$0xff]
          %v961 = vld [vmem:[%s957 + $0x18] sm:$0xff]
          %v962 = vld [vmem:[%s957 + $0x20] sm:$0xff]
          %v963 = vld [vmem:[%s957 + $0x28] sm:$0xff]
          %v964 = vld [vmem:[%s957 + $0x30] sm:$0xff]
          %v965 = vld [vmem:[%s957 + $0x38] sm:$0xff]
          %v966 = vld [vmem:[%s957 + $0x40] sm:$0xff]
          %v967 = vld [vmem:[%s957 + $0x48] sm:$0xff]
          %v968 = vld [vmem:[%s957 + $0x50] sm:$0xff]
          %v969 = vld [vmem:[%s957 + $0x58] sm:$0xff]
          %v970 = vld [vmem:[%s957 + $0x60] sm:$0xff]
          %v971 = vld [vmem:[%s957 + $0x68] sm:$0xff]
          %v972 = vld [vmem:[%s957 + $0x70] sm:$0xff]
          %v973 = vld [vmem:[%s957 + $0x78] sm:$0xff]
          %v974 = vlaneseq
          %v975 = vshrl.u32 %v974, 7
          %v976 = vsub.s32 4, %v975
          %v977 = vrot.slane %v226, %v976
          %978 = vmatprep.subr.mxu0 0.0
          %979 = vmatpush1.msra.mxu0 %v958
          %980 = vmatprep.subr.mxu0 0.0
          %981 = vmatpush1.msra.mxu0 %v959
          %982 = vmatprep.subr.mxu0 0.0
          %983 = vmatpush1.msra.mxu0 %v960
          %984 = vmatprep.subr.mxu0 0.0
          %985 = vmatpush1.msra.mxu0 %v961
          %986 = vmatprep.subr.mxu0 0.0
          %987 = vmatpush1.msra.mxu0 %v962
          %988 = vmatprep.subr.mxu0 0.0
          %989 = vmatpush1.msra.mxu0 %v963
          %990 = vmatprep.subr.mxu0 0.0
          %991 = vmatpush1.msra.mxu0 %v964
          %992 = vmatprep.subr.mxu0 0.0
          %993 = vmatpush1.msra.mxu0 %v965
          %994 = vmatprep.subr.mxu0 0.0
          %995 = vmatpush1.msra.mxu0 %v966
          %996 = vmatprep.subr.mxu0 0.0
          %997 = vmatpush1.msra.mxu0 %v967
          %998 = vmatprep.subr.mxu0 0.0
          %999 = vmatpush1.msra.mxu0 %v968
          %1000 = vmatprep.subr.mxu0 0.0
          %1001 = vmatpush1.msra.mxu0 %v969
          %1002 = vmatprep.subr.mxu0 0.0
          %1003 = vmatpush1.msra.mxu0 %v970
          %1004 = vmatprep.subr.mxu0 0.0
          %1005 = vmatpush1.msra.mxu0 %v971
          %1006 = vmatprep.subr.mxu0 0.0
          %1007 = vmatpush1.msra.mxu0 %v972
          %1008 = vmatprep.subr.mxu0 0.0
          %1009 = vmatpush1.msra.mxu0 %v973
          %1010 = vmatprep.subr.mxu0 0.0
          %1011 = vmatpush1.msra.mxu0 0.0
          %1012 = vmatprep.subr.mxu0 0.0
          %1013 = vmatpush1.msra.mxu0 0.0
          %1014 = vmatprep.subr.mxu0 0.0
          %1015 = vmatpush1.msra.mxu0 0.0
          %1016 = vmatprep.subr.mxu0 0.0
          %1017 = vmatpush1.msra.mxu0 0.0
          %1018 = vmatprep.subr.mxu0 0.0
          %1019 = vmatpush1.msra.mxu0 0.0
          %1020 = vmatprep.subr.mxu0 0.0
          %1021 = vmatpush1.msra.mxu0 0.0
          %1022 = vmatprep.subr.mxu0 0.0
          %1023 = vmatpush1.msra.mxu0 0.0
          %1024 = vmatprep.subr.mxu0 0.0
          %1025 = vmatpush1.msra.mxu0 0.0
          %1026 = vmatprep.subr.mxu0 0.0
          %1027 = vmatpush1.msra.mxu0 0.0
          %1028 = vmatprep.subr.mxu0 0.0
          %1029 = vmatpush1.msra.mxu0 0.0
          %1030 = vmatprep.subr.mxu0 0.0
          %1031 = vmatpush1.msra.mxu0 0.0
          %1032 = vmatprep.subr.mxu0 0.0
          %1033 = vmatpush1.msra.mxu0 0.0
          %1034 = vmatprep.subr.mxu0 0.0
          %1035 = vmatpush1.msra.mxu0 0.0
          %1036 = vmatprep.subr.mxu0 0.0
          %1037 = vmatpush1.msra.mxu0 0.0
          %1038 = vmatprep.subr.mxu0 0.0
          %1039 = vmatpush1.msra.mxu0 0.0
          %1040 = vmatprep.subr.mxu0 0.0
          %1041 = vmatpush1.msra.mxu0 0.0
          %1042 = vmatprep.mubr.f32.mxu0 0.0
          %1043 = vmatmul.mubr.f32.gmra.mrb[0].mxu0 %v956
          %v1044 = vpop.f32.mrb[0].mxu0
          %v1045 = vadd.f32 %v977, %v1044
          %v1046 = vpop.f32.mrb[0].mxu0
          %1047 = vdwg.mxu0
          %1048 = vrot.lane.b32.xlu0 %v1045, 64
          %v1049 = vpop.permute.xlu0 %1048
          %v1050 = vmul.f32 %v1049, 0.5
          %v1051 = vmul.f32 %v1050, 1.442695
          %v1052 = vpow.pop %v1051
          %v1053 = vmul.f32 %v1052, %v229
          %v1054 = vadd.f32 %v1045, %v1053
          %1055 = vst [vmem:[%s225] sm:$0xff] %v1054
        $region44: #{toy_ae_forward.1} parent=31 // pred_fallthru
          _
        %p1056 = scmp.lt.s32.totalorder %s17, 1
        %s1057 = scalar_select %p1056, %s17, 1
        %s1058 = smul.addr %s1057, 8
        %s1059 = scalar_lea.vmem %s3, %s1058
        // Predicated region
        $region45: #{toy_ae_forward.1} parent=31 // pred_check
          %p1060 = pneg %p113
        $region46: #{toy_ae_forward.1} parent=31 // pred_check_branch
          %1062 = sbr.rel (%p1060) target = $region48
        $region47: #{toy_ae_forward.1} parent=31 // pred_region
          _
        $region48: #{toy_ae_forward.1} parent=31 // pred_fallthru
          _
      $region32: #{toy_ae_forward.1} parent=5 // pred_fallthru
        _
      %p1063 = scmp.le.s32.totalorder 2, %s12
      // Predicated region
      $region49: #{toy_ae_forward.1} parent=5 // pred_check
        %p1064 = pneg %p1063
      $region50: #{toy_ae_forward.1} parent=5 // pred_check_branch
        %1066 = sbr.rel (%p1064) target = $region52
      $region51: #{toy_ae_forward.1} parent=5 // pred_region
        %s1067 = ssub.s32 %s12, 2
        // Predicated region
        $region53: #{toy_ae_forward.1} parent=51 // pred_check
          %p1068 = pneg %p119
        $region54: #{toy_ae_forward.1} parent=51 // pred_check_branch
          %1070 = sbr.rel (%p1068) target = $region56
        $region55: #{toy_ae_forward.1} parent=51 // pred_region
          %p1071 = scmp.lt.s32.totalorder %s18, 1
          %s1072 = scalar_select %p1071, %s18, 1
          %s1073 = smul.addr %s1072, 8
          %s1074 = scalar_lea.vmem %s3, %s1073
        $region56: #{toy_ae_forward.1} parent=51 // pred_fallthru
          _
      $region52: #{toy_ae_forward.1} parent=5 // pred_fallthru
        _
    $region6: #{toy_ae_forward.1} parent=1 // loop_footer
      %s16 = sadd.s32 1, %s12
    $region7: #{toy_ae_forward.1} parent=1 // loop_footer_branch
      %11 = sbr.rel target = $region3
    $region8: #{toy_ae_forward.1} parent=1 // loop_exit
      _
    %1075 = vsyncpa [#allocation3], 1
    %s1076 = scalar_lea.sflag [#allocation3], 1
    %1077 = vsyncpa %s1076, 1

</llo_original>
